<compile_context>
chip_gen: v7x
topology: tpu7x:2x2x1
jax: 0.10.0
libtpu: 0.0.40
codegen_flags: <defaults>
</compile_context>

<pallas_src>
import jax
import jax.numpy as jnp
from jax.experimental import pallas as pl
from jax.experimental.pallas import tpu as pltpu


D_IN = 28 * 28                      # 784
_DIMS = [D_IN, 128, 64, 36, 18, 36, 64, 128, D_IN]       # original layer widths
_PAD_DIMS = [D_IN, 128, 128, 128, 128, 128, 128, 128, D_IN]  # lane-padded widths


def _round_up(n, m):
    return ((n + m - 1) // m) * m


# ---------------------------------------------------------------------------
# Kernel: 4 encoder + 4 decoder Linear layers, fused. All params VMEM-resident.
# ---------------------------------------------------------------------------
def _ae_kernel(
    x_ref,
    w1_ref, b1_ref, w2_ref, b2_ref, w3_ref, b3_ref, w4_ref, b4_ref,   # encoder
    w5_ref, b5_ref, w6_ref, b6_ref, w7_ref, b7_ref, w8_ref, b8_ref,   # decoder
    o_ref,
):
    def linear(h, w_ref, b_ref):
        # Cast activations to the weight dtype (f32 or bf16) for the MXU,
        # accumulate in f32, add the f32 bias.
        return (
            jnp.dot(h.astype(w_ref.dtype), w_ref[...],
                    preferred_element_type=jnp.float32)
            + b_ref[...]
        )

    x = x_ref[...]                                     # (TB, 784)

    # ---- encoder ----
    h = jnp.maximum(linear(x, w1_ref, b1_ref), 0.0)    # (TB, 128)
    h = jnp.maximum(linear(h, w2_ref, b2_ref), 0.0)    # (TB, 128) [64 + 0-pad]
    h = jnp.maximum(linear(h, w3_ref, b3_ref), 0.0)    # (TB, 128) [36 + 0-pad]
    h = linear(h, w4_ref, b4_ref)                      # (TB, 128) [18 + 0-pad], no act

    # ---- decoder ----
    h = jnp.maximum(linear(h, w5_ref, b5_ref), 0.0)    # (TB, 128) [36 + 0-pad]
    h = jnp.maximum(linear(h, w6_ref, b6_ref), 0.0)    # (TB, 128) [64 + 0-pad]
    h = jnp.maximum(linear(h, w7_ref, b7_ref), 0.0)    # (TB, 128)
    h = linear(h, w8_ref, b8_ref)                      # (TB, 784)
    o_ref[...] = jax.nn.sigmoid(h).astype(o_ref.dtype)


# ---------------------------------------------------------------------------
# Wrapper
# ---------------------------------------------------------------------------
def mnist_ae_small_forward(x, params, *, tile_b=256, io_dtype=jnp.float32):
    """x: (B, 784) float32. params: list of 8 (W, b), W shaped (in, out)."""
    B, D = x.shape
    assert D == D_IN
    io_dtype = jnp.dtype(io_dtype)
    io_bytes = io_dtype.itemsize

    # --- batch tiling: pick a tile, pad B up to a multiple of it -------------
    row_mult = 16 if io_bytes == 2 else 8          # sublane packing granularity
    tb = min(int(tile_b), _round_up(B, row_mult))
    tb = max(row_mult, (tb // row_mult) * row_mult)
    B_pad = _round_up(B, tb)

    x_io = x.astype(io_dtype)
    if B_pad != B:
        x_io = jnp.pad(x_io, ((0, B_pad - B), (0, 0)))

    # --- lane-pad params to 128-wide hidden dims, flatten to kernel order ----
    flat = []
    for li, (w, b) in enumerate(params):
        in_p, out_p = _PAD_DIMS[li], _PAD_DIMS[li + 1]
        w_p = jnp.pad(w, ((0, in_p - w.shape[0]), (0, out_p - w.shape[1])))
        b_p = jnp.pad(b.reshape(1, -1), ((0, 0), (0, out_p - b.shape[0])))
        flat.append(w_p.astype(io_dtype))          # weights in io_dtype (MXU)
        flat.append(b_p.astype(jnp.float32))       # biases stay f32 (tiny)

    # --- specs ---------------------------------------------------------------
    x_spec = pl.BlockSpec((tb, D), lambda i: (i, 0))
    out_spec = pl.BlockSpec((tb, D), lambda i: (i, 0))
    # Full-array blocks with a constant index_map: DMA'd once, VMEM-resident.
    param_specs = [pl.BlockSpec(p.shape, lambda i: (0, 0)) for p in flat]

    # --- VMEM budget (x/out double-buffered + params + f32 intermediates) ----
    param_bytes = sum(int(p.size) * p.dtype.itemsize for p in flat)
    vmem_needed = (
        2 * 2 * tb * D * io_bytes          # x + out, 2 pipeline buffers each
        + 2 * param_bytes                  # params (default double-buffered)
        + 2 * tb * (D + 128) * 4           # live f32 intermediates headroom
    )
    vmem_limit = min(64 * 1024 * 1024, max(32 * 1024 * 1024, 2 * vmem_needed))

    # --- advisory cost estimate ----------------------------------------------
    flops = 2 * B_pad * sum(
        _PAD_DIMS[i] * _PAD_DIMS[i + 1] for i in range(len(_PAD_DIMS) - 1)
    )
    cost = pl.CostEstimate(
        flops=int(flops),
        transcendentals=int(B_pad * D),                      # sigmoid
        bytes_accessed=int(2 * B_pad * D * io_bytes + param_bytes),
    )

    out = pl.pallas_call(
        _ae_kernel,
        out_shape=jax.ShapeDtypeStruct((B_pad, D), io_dtype),
        grid=(B_pad // tb,),
        in_specs=[x_spec] + param_specs,
        out_specs=out_spec,
        compiler_params=pltpu.CompilerParams(
            dimension_semantics=("parallel",),
            vmem_limit_bytes=int(vmem_limit),
        ),
        cost_estimate=cost,
    )(x_io, *flat)

    return out[:B]


# ---------------------------------------------------------------------------
# Deterministic parameter init (PyTorch-Linear-style uniform ±1/sqrt(fan_in))
# ---------------------------------------------------------------------------
def init_params(key):
    params = []
    for li in range(len(_DIMS) - 1):
        fan_in, fan_out = _DIMS[li], _DIMS[li + 1]
        key, kw, kb = jax.random.split(key, 3)
        bound = 1.0 / jnp.sqrt(fan_in)
        w = jax.random.uniform(kw, (fan_in, fan_out), jnp.float32,
                               minval=-bound, maxval=bound)
        b = jax.random.uniform(kb, (fan_out,), jnp.float32,
                               minval=-bound, maxval=bound)
        params.append((w, b))
    return params


# ---------------------------------------------------------------------------
# Reference (plain JAX) for sanity checking
# ---------------------------------------------------------------------------
def reference_forward(x, params):
    h = x
    relu_after = [True, True, True, False, True, True, True, False]
    for (w, b), act in zip(params, relu_after):
        h = h @ w + b
        if act:
            h = jnp.maximum(h, 0.0)
    return jax.nn.sigmoid(h)


if __name__ == "__main__":
    key = jax.random.PRNGKey(0)
    kp, kx = jax.random.split(key)
    params = init_params(kp)

    # 1) small batch (grid length 1), strict f32 check
    x_small = jax.random.uniform(kx, (8, D_IN), jnp.float32)
    out = jax.block_until_ready(mnist_ae_small_forward(x_small, params))
    ref = reference_forward(x_small, params)
    assert out.shape == (8, D_IN)
    assert jnp.allclose(out, ref, atol=1e-5, rtol=1e-5)

    # 2) ragged batch + multi-step grid (exercises pad/slice path), f32
    x_big = jax.random.uniform(jax.random.PRNGKey(1), (300, D_IN), jnp.float32)
    out2 = jax.block_until_ready(
        mnist_ae_small_forward(x_big, params, tile_b=128)
    )
    ref2 = reference_forward(x_big, params)
    assert out2.shape == (300, D_IN)
    assert jnp.allclose(out2, ref2, atol=1e-5, rtol=1e-5)

    # 3) bf16 I/O path (halves HBM traffic); loose tolerance vs f32 reference
    out3 = jax.block_until_ready(
        mnist_ae_small_forward(x_big, params, tile_b=128, io_dtype=jnp.bfloat16)
    )
    assert jnp.max(jnp.abs(out3.astype(jnp.float32) - ref2)) < 5e-2

    print("KERNEL_OK")
</pallas_src>

<mosaic_0001>
module attributes {stable_mosaic.version = 11 : i64} {
  func.func @_ae_kernel(%arg0: i32, %arg1: memref<8x784xf32, #tpu.memory_space<vmem>>, %arg2: memref<784x128xf32, #tpu.memory_space<vmem>>, %arg3: memref<1x128xf32, #tpu.memory_space<vmem>>, %arg4: memref<128x128xf32, #tpu.memory_space<vmem>>, %arg5: memref<1x128xf32, #tpu.memory_space<vmem>>, %arg6: memref<128x128xf32, #tpu.memory_space<vmem>>, %arg7: memref<1x128xf32, #tpu.memory_space<vmem>>, %arg8: memref<128x128xf32, #tpu.memory_space<vmem>>, %arg9: memref<1x128xf32, #tpu.memory_space<vmem>>, %arg10: memref<128x128xf32, #tpu.memory_space<vmem>>, %arg11: memref<1x128xf32, #tpu.memory_space<vmem>>, %arg12: memref<128x128xf32, #tpu.memory_space<vmem>>, %arg13: memref<1x128xf32, #tpu.memory_space<vmem>>, %arg14: memref<128x128xf32, #tpu.memory_space<vmem>>, %arg15: memref<1x128xf32, #tpu.memory_space<vmem>>, %arg16: memref<128x784xf32, #tpu.memory_space<vmem>>, %arg17: memref<1x784xf32, #tpu.memory_space<vmem>>, %arg18: memref<8x784xf32, #tpu.memory_space<vmem>>) attributes {dimension_semantics = [#tpu.dimension_semantics<parallel>], iteration_bounds = array<i64: 1>, scalar_prefetch = 0 : i64, scratch_operands = 0 : i64, tpu.core_type = #tpu.core_type<tc>, window_params = [{transform_indices = @transform_0, window_bounds = array<i64: 8, 784>}, {pipeline_mode = #tpu.pipeline_mode<synchronous>, transform_indices = @transform_1, window_bounds = array<i64: 784, 128>}, {pipeline_mode = #tpu.pipeline_mode<synchronous>, transform_indices = @transform_2, window_bounds = array<i64: 1, 128>}, {pipeline_mode = #tpu.pipeline_mode<synchronous>, transform_indices = @transform_3, window_bounds = array<i64: 128, 128>}, {pipeline_mode = #tpu.pipeline_mode<synchronous>, transform_indices = @transform_4, window_bounds = array<i64: 1, 128>}, {pipeline_mode = #tpu.pipeline_mode<synchronous>, transform_indices = @transform_5, window_bounds = array<i64: 128, 128>}, {pipeline_mode = #tpu.pipeline_mode<synchronous>, transform_indices = @transform_6, window_bounds = array<i64: 1, 128>}, {pipeline_mode = #tpu.pipeline_mode<synchronous>, transform_indices = @transform_7, window_bounds = array<i64: 128, 128>}, {pipeline_mode = #tpu.pipeline_mode<synchronous>, transform_indices = @transform_8, window_bounds = array<i64: 1, 128>}, {pipeline_mode = #tpu.pipeline_mode<synchronous>, transform_indices = @transform_9, window_bounds = array<i64: 128, 128>}, {pipeline_mode = #tpu.pipeline_mode<synchronous>, transform_indices = @transform_10, window_bounds = array<i64: 1, 128>}, {pipeline_mode = #tpu.pipeline_mode<synchronous>, transform_indices = @transform_11, window_bounds = array<i64: 128, 128>}, {pipeline_mode = #tpu.pipeline_mode<synchronous>, transform_indices = @transform_12, window_bounds = array<i64: 1, 128>}, {pipeline_mode = #tpu.pipeline_mode<synchronous>, transform_indices = @transform_13, window_bounds = array<i64: 128, 128>}, {pipeline_mode = #tpu.pipeline_mode<synchronous>, transform_indices = @transform_14, window_bounds = array<i64: 1, 128>}, {pipeline_mode = #tpu.pipeline_mode<synchronous>, transform_indices = @transform_15, window_bounds = array<i64: 128, 784>}, {pipeline_mode = #tpu.pipeline_mode<synchronous>, transform_indices = @transform_16, window_bounds = array<i64: 1, 784>}, {transform_indices = @transform_17, window_bounds = array<i64: 8, 784>}]} {
    %c0 = arith.constant 0 : index
    %c0_0 = arith.constant 0 : index
    %0 = vector.load %arg1[%c0, %c0_0] : memref<8x784xf32, #tpu.memory_space<vmem>>, vector<8x784xf32>
    %c0_1 = arith.constant 0 : index
    %c0_2 = arith.constant 0 : index
    %1 = vector.load %arg2[%c0_1, %c0_2] : memref<784x128xf32, #tpu.memory_space<vmem>>, vector<784x128xf32>
    %cst = arith.constant dense<0.000000e+00> : vector<8x128xf32>
    %2 = tpu.matmul %0, %1, %cst {dimension_numbers = #tpu.dot_dimension_numbers<[1], [0], [0], [1], [0, 0, 1, 1], [], []>} : vector<8x784xf32>, vector<784x128xf32>, vector<8x128xf32> -> vector<8x128xf32>
    %c0_3 = arith.constant 0 : index
    %c0_4 = arith.constant 0 : index
    %3 = vector.load %arg3[%c0_3, %c0_4] : memref<1x128xf32, #tpu.memory_space<vmem>>, vector<1x128xf32>
    %4 = vector.broadcast %3 : vector<1x128xf32> to vector<8x128xf32>
    %5 = arith.addf %2, %4 : vector<8x128xf32>
    %cst_5 = arith.constant 0.000000e+00 : f32
    %6 = vector.broadcast %cst_5 : f32 to vector<8x128xf32>
    %7 = arith.maximumf %5, %6 : vector<8x128xf32>
    %c0_6 = arith.constant 0 : index
    %c0_7 = arith.constant 0 : index
    %8 = vector.load %arg4[%c0_6, %c0_7] : memref<128x128xf32, #tpu.memory_space<vmem>>, vector<128x128xf32>
    %cst_8 = arith.constant dense<0.000000e+00> : vector<8x128xf32>
    %9 = tpu.matmul %7, %8, %cst_8 {dimension_numbers = #tpu.dot_dimension_numbers<[1], [0], [0], [1], [0, 0, 1, 1], [], []>} : vector<8x128xf32>, vector<128x128xf32>, vector<8x128xf32> -> vector<8x128xf32>
    %c0_9 = arith.constant 0 : index
    %c0_10 = arith.constant 0 : index
    %10 = vector.load %arg5[%c0_9, %c0_10] : memref<1x128xf32, #tpu.memory_space<vmem>>, vector<1x128xf32>
    %11 = vector.broadcast %10 : vector<1x128xf32> to vector<8x128xf32>
    %12 = arith.addf %9, %11 : vector<8x128xf32>
    %cst_11 = arith.constant 0.000000e+00 : f32
    %13 = vector.broadcast %cst_11 : f32 to vector<8x128xf32>
    %14 = arith.maximumf %12, %13 : vector<8x128xf32>
    %c0_12 = arith.constant 0 : index
    %c0_13 = arith.constant 0 : index
    %15 = vector.load %arg6[%c0_12, %c0_13] : memref<128x128xf32, #tpu.memory_space<vmem>>, vector<128x128xf32>
    %cst_14 = arith.constant dense<0.000000e+00> : vector<8x128xf32>
    %16 = tpu.matmul %14, %15, %cst_14 {dimension_numbers = #tpu.dot_dimension_numbers<[1], [0], [0], [1], [0, 0, 1, 1], [], []>} : vector<8x128xf32>, vector<128x128xf32>, vector<8x128xf32> -> vector<8x128xf32>
    %c0_15 = arith.constant 0 : index
    %c0_16 = arith.constant 0 : index
    %17 = vector.load %arg7[%c0_15, %c0_16] : memref<1x128xf32, #tpu.memory_space<vmem>>, vector<1x128xf32>
    %18 = vector.broadcast %17 : vector<1x128xf32> to vector<8x128xf32>
    %19 = arith.addf %16, %18 : vector<8x128xf32>
    %cst_17 = arith.constant 0.000000e+00 : f32
    %20 = vector.broadcast %cst_17 : f32 to vector<8x128xf32>
    %21 = arith.maximumf %19, %20 : vector<8x128xf32>
    %c0_18 = arith.constant 0 : index
    %c0_19 = arith.constant 0 : index
    %22 = vector.load %arg8[%c0_18, %c0_19] : memref<128x128xf32, #tpu.memory_space<vmem>>, vector<128x128xf32>
    %cst_20 = arith.constant dense<0.000000e+00> : vector<8x128xf32>
    %23 = tpu.matmul %21, %22, %cst_20 {dimension_numbers = #tpu.dot_dimension_numbers<[1], [0], [0], [1], [0, 0, 1, 1], [], []>} : vector<8x128xf32>, vector<128x128xf32>, vector<8x128xf32> -> vector<8x128xf32>
    %c0_21 = arith.constant 0 : index
    %c0_22 = arith.constant 0 : index
    %24 = vector.load %arg9[%c0_21, %c0_22] : memref<1x128xf32, #tpu.memory_space<vmem>>, vector<1x128xf32>
    %25 = vector.broadcast %24 : vector<1x128xf32> to vector<8x128xf32>
    %26 = arith.addf %23, %25 : vector<8x128xf32>
    %c0_23 = arith.constant 0 : index
    %c0_24 = arith.constant 0 : index
    %27 = vector.load %arg10[%c0_23, %c0_24] : memref<128x128xf32, #tpu.memory_space<vmem>>, vector<128x128xf32>
    %cst_25 = arith.constant dense<0.000000e+00> : vector<8x128xf32>
    %28 = tpu.matmul %26, %27, %cst_25 {dimension_numbers = #tpu.dot_dimension_numbers<[1], [0], [0], [1], [0, 0, 1, 1], [], []>} : vector<8x128xf32>, vector<128x128xf32>, vector<8x128xf32> -> vector<8x128xf32>
    %c0_26 = arith.constant 0 : index
    %c0_27 = arith.constant 0 : index
    %29 = vector.load %arg11[%c0_26, %c0_27] : memref<1x128xf32, #tpu.memory_space<vmem>>, vector<1x128xf32>
    %30 = vector.broadcast %29 : vector<1x128xf32> to vector<8x128xf32>
    %31 = arith.addf %28, %30 : vector<8x128xf32>
    %cst_28 = arith.constant 0.000000e+00 : f32
    %32 = vector.broadcast %cst_28 : f32 to vector<8x128xf32>
    %33 = arith.maximumf %31, %32 : vector<8x128xf32>
    %c0_29 = arith.constant 0 : index
    %c0_30 = arith.constant 0 : index
    %34 = vector.load %arg12[%c0_29, %c0_30] : memref<128x128xf32, #tpu.memory_space<vmem>>, vector<128x128xf32>
    %cst_31 = arith.constant dense<0.000000e+00> : vector<8x128xf32>
    %35 = tpu.matmul %33, %34, %cst_31 {dimension_numbers = #tpu.dot_dimension_numbers<[1], [0], [0], [1], [0, 0, 1, 1], [], []>} : vector<8x128xf32>, vector<128x128xf32>, vector<8x128xf32> -> vector<8x128xf32>
    %c0_32 = arith.constant 0 : index
    %c0_33 = arith.constant 0 : index
    %36 = vector.load %arg13[%c0_32, %c0_33] : memref<1x128xf32, #tpu.memory_space<vmem>>, vector<1x128xf32>
    %37 = vector.broadcast %36 : vector<1x128xf32> to vector<8x128xf32>
    %38 = arith.addf %35, %37 : vector<8x128xf32>
    %cst_34 = arith.constant 0.000000e+00 : f32
    %39 = vector.broadcast %cst_34 : f32 to vector<8x128xf32>
    %40 = arith.maximumf %38, %39 : vector<8x128xf32>
    %c0_35 = arith.constant 0 : index
    %c0_36 = arith.constant 0 : index
    %41 = vector.load %arg14[%c0_35, %c0_36] : memref<128x128xf32, #tpu.memory_space<vmem>>, vector<128x128xf32>
    %cst_37 = arith.constant dense<0.000000e+00> : vector<8x128xf32>
    %42 = tpu.matmul %40, %41, %cst_37 {dimension_numbers = #tpu.dot_dimension_numbers<[1], [0], [0], [1], [0, 0, 1, 1], [], []>} : vector<8x128xf32>, vector<128x128xf32>, vector<8x128xf32> -> vector<8x128xf32>
    %c0_38 = arith.constant 0 : index
    %c0_39 = arith.constant 0 : index
    %43 = vector.load %arg15[%c0_38, %c0_39] : memref<1x128xf32, #tpu.memory_space<vmem>>, vector<1x128xf32>
    %44 = vector.broadcast %43 : vector<1x128xf32> to vector<8x128xf32>
    %45 = arith.addf %42, %44 : vector<8x128xf32>
    %cst_40 = arith.constant 0.000000e+00 : f32
    %46 = vector.broadcast %cst_40 : f32 to vector<8x128xf32>
    %47 = arith.maximumf %45, %46 : vector<8x128xf32>
    %c0_41 = arith.constant 0 : index
    %c0_42 = arith.constant 0 : index
    %48 = vector.load %arg16[%c0_41, %c0_42] : memref<128x784xf32, #tpu.memory_space<vmem>>, vector<128x784xf32>
    %cst_43 = arith.constant dense<0.000000e+00> : vector<8x784xf32>
    %49 = tpu.matmul %47, %48, %cst_43 {dimension_numbers = #tpu.dot_dimension_numbers<[1], [0], [0], [1], [0, 0, 1, 1], [], []>} : vector<8x128xf32>, vector<128x784xf32>, vector<8x784xf32> -> vector<8x784xf32>
    %c0_44 = arith.constant 0 : index
    %c0_45 = arith.constant 0 : index
    %50 = vector.load %arg17[%c0_44, %c0_45] : memref<1x784xf32, #tpu.memory_space<vmem>>, vector<1x784xf32>
    %51 = vector.broadcast %50 : vector<1x784xf32> to vector<8x784xf32>
    %52 = arith.addf %49, %51 : vector<8x784xf32>
    %53 = arith.negf %52 : vector<8x784xf32>
    %54 = math.exp %53 : vector<8x784xf32>
    %cst_46 = arith.constant 1.000000e+00 : f32
    %55 = vector.broadcast %cst_46 : f32 to vector<8x784xf32>
    %56 = arith.addf %55, %54 : vector<8x784xf32>
    %57 = arith.divf %55, %56 : vector<8x784xf32>
    %c0_47 = arith.constant 0 : index
    %c0_48 = arith.constant 0 : index
    %58 = vector.load %arg18[%c0_47, %c0_48] : memref<8x784xf32, #tpu.memory_space<vmem>>, vector<8x784xf32>
    tpu.vector_store %arg18[%c0_47, %c0_48], %57 {strides = array<i32>} : memref<8x784xf32, #tpu.memory_space<vmem>>, vector<8x784xf32>,
    return
  }
  func.func @transform_0(%arg0: i32) -> (i32, i32) {
    %c0_i32 = arith.constant 0 : i32
    %c0_i32_0 = arith.constant 0 : i32
    return %arg0, %c0_i32 : i32, i32
  }
  func.func @transform_1(%arg0: i32) -> (i32, i32) {
    %c0_i32 = arith.constant 0 : i32
    %c0_i32_0 = arith.constant 0 : i32
    %c0_i32_1 = arith.constant 0 : i32
    return %c0_i32, %c0_i32_0 : i32, i32
  }
  func.func @transform_2(%arg0: i32) -> (i32, i32) {
    %c0_i32 = arith.constant 0 : i32
    %c0_i32_0 = arith.constant 0 : i32
    %c0_i32_1 = arith.constant 0 : i32
    return %c0_i32, %c0_i32_0 : i32, i32
  }
  func.func @transform_3(%arg0: i32) -> (i32, i32) {
    %c0_i32 = arith.constant 0 : i32
    %c0_i32_0 = arith.constant 0 : i32
    %c0_i32_1 = arith.constant 0 : i32
    return %c0_i32, %c0_i32_0 : i32, i32
  }
  func.func @transform_4(%arg0: i32) -> (i32, i32) {
    %c0_i32 = arith.constant 0 : i32
    %c0_i32_0 = arith.constant 0 : i32
    %c0_i32_1 = arith.constant 0 : i32
    return %c0_i32, %c0_i32_0 : i32, i32
  }
  func.func @transform_5(%arg0: i32) -> (i32, i32) {
    %c0_i32 = arith.constant 0 : i32
    %c0_i32_0 = arith.constant 0 : i32
    %c0_i32_1 = arith.constant 0 : i32
    return %c0_i32, %c0_i32_0 : i32, i32
  }
  func.func @transform_6(%arg0: i32) -> (i32, i32) {
    %c0_i32 = arith.constant 0 : i32
    %c0_i32_0 = arith.constant 0 : i32
    %c0_i32_1 = arith.constant 0 : i32
    return %c0_i32, %c0_i32_0 : i32, i32
  }
  func.func @transform_7(%arg0: i32) -> (i32, i32) {
    %c0_i32 = arith.constant 0 : i32
    %c0_i32_0 = arith.constant 0 : i32
    %c0_i32_1 = arith.constant 0 : i32
    return %c0_i32, %c0_i32_0 : i32, i32
  }
  func.func @transform_8(%arg0: i32) -> (i32, i32) {
    %c0_i32 = arith.constant 0 : i32
    %c0_i32_0 = arith.constant 0 : i32
    %c0_i32_1 = arith.constant 0 : i32
    return %c0_i32, %c0_i32_0 : i32, i32
  }
  func.func @transform_9(%arg0: i32) -> (i32, i32) {
    %c0_i32 = arith.constant 0 : i32
    %c0_i32_0 = arith.constant 0 : i32
    %c0_i32_1 = arith.constant 0 : i32
    return %c0_i32, %c0_i32_0 : i32, i32
  }
  func.func @transform_10(%arg0: i32) -> (i32, i32) {
    %c0_i32 = arith.constant 0 : i32
    %c0_i32_0 = arith.constant 0 : i32
    %c0_i32_1 = arith.constant 0 : i32
    return %c0_i32, %c0_i32_0 : i32, i32
  }
  func.func @transform_11(%arg0: i32) -> (i32, i32) {
    %c0_i32 = arith.constant 0 : i32
    %c0_i32_0 = arith.constant 0 : i32
    %c0_i32_1 = arith.constant 0 : i32
    return %c0_i32, %c0_i32_0 : i32, i32
  }
  func.func @transform_12(%arg0: i32) -> (i32, i32) {
    %c0_i32 = arith.constant 0 : i32
    %c0_i32_0 = arith.constant 0 : i32
    %c0_i32_1 = arith.constant 0 : i32
    return %c0_i32, %c0_i32_0 : i32, i32
  }
  func.func @transform_13(%arg0: i32) -> (i32, i32) {
    %c0_i32 = arith.constant 0 : i32
    %c0_i32_0 = arith.constant 0 : i32
    %c0_i32_1 = arith.constant 0 : i32
    return %c0_i32, %c0_i32_0 : i32, i32
  }
  func.func @transform_14(%arg0: i32) -> (i32, i32) {
    %c0_i32 = arith.constant 0 : i32
    %c0_i32_0 = arith.constant 0 : i32
    %c0_i32_1 = arith.constant 0 : i32
    return %c0_i32, %c0_i32_0 : i32, i32
  }
  func.func @transform_15(%arg0: i32) -> (i32, i32) {
    %c0_i32 = arith.constant 0 : i32
    %c0_i32_0 = arith.constant 0 : i32
    %c0_i32_1 = arith.constant 0 : i32
    return %c0_i32, %c0_i32_0 : i32, i32
  }
  func.func @transform_16(%arg0: i32) -> (i32, i32) {
    %c0_i32 = arith.constant 0 : i32
    %c0_i32_0 = arith.constant 0 : i32
    %c0_i32_1 = arith.constant 0 : i32
    return %c0_i32, %c0_i32_0 : i32, i32
  }
  func.func @transform_17(%arg0: i32) -> (i32, i32) {
    %c0_i32 = arith.constant 0 : i32
    %c0_i32_0 = arith.constant 0 : i32
    return %arg0, %c0_i32 : i32, i32
  }
}

</mosaic_0001>

<llo_original>
// kernel: tpu_custom_call.1
$region0: #{tpu_custom_call.1}
  #allocation0 [shape = 'u32[]', space=smem, size = 0x4, offset = 0x4, fixed_abs, tag = 'smem constant byte address 0x4 - core index']
  #allocation1 [shape = 'u32[144,128]{1,0:T(1,128)}', space=vmem, size = 0x12000, scoped, tag = 'internal scratch']
  %s0 = inlined_call_operand.vmem [shape: f32[8,784], index: 0, kind: input, shape index: {}]
  %s1 = inlined_call_operand.vmem [shape: f32[784,128], index: 1, kind: input, shape index: {}]
  %s2 = inlined_call_operand.vmem [shape: f32[1,128], index: 2, kind: input, shape index: {}]
  %s3 = inlined_call_operand.vmem [shape: f32[128,128], index: 3, kind: input, shape index: {}]
  %s4 = inlined_call_operand.vmem [shape: f32[1,128], index: 4, kind: input, shape index: {}]
  %s5 = inlined_call_operand.vmem [shape: f32[128,128], index: 5, kind: input, shape index: {}]
  %s6 = inlined_call_operand.vmem [shape: f32[1,128], index: 6, kind: input, shape index: {}]
  %s7 = inlined_call_operand.vmem [shape: f32[128,128], index: 7, kind: input, shape index: {}]
  %s8 = inlined_call_operand.vmem [shape: f32[1,128], index: 8, kind: input, shape index: {}]
  %s9 = inlined_call_operand.vmem [shape: f32[128,128], index: 9, kind: input, shape index: {}]
  %s10 = inlined_call_operand.vmem [shape: f32[1,128], index: 10, kind: input, shape index: {}]
  %s11 = inlined_call_operand.vmem [shape: f32[128,128], index: 11, kind: input, shape index: {}]
  %s12 = inlined_call_operand.vmem [shape: f32[1,128], index: 12, kind: input, shape index: {}]
  %s13 = inlined_call_operand.vmem [shape: f32[128,128], index: 13, kind: input, shape index: {}]
  %s14 = inlined_call_operand.vmem [shape: f32[1,128], index: 14, kind: input, shape index: {}]
  %s15 = inlined_call_operand.vmem [shape: f32[128,784], index: 15, kind: input, shape index: {}]
  %s16 = inlined_call_operand.vmem [shape: f32[1,784], index: 16, kind: input, shape index: {}]
  %s17 = inlined_call_operand.hbm [shape: f32[8,784], index: 17, kind: output, shape index: {}]
  %s18 = sld [smem:[#allocation0]]
  $region78: #{tpu_custom_call.1} parent=0
    _
  %s20 = ssub.s32 1, %s18
  %s21 = scalar_select 0, %s20, %s18
  $region1: #{tpu_custom_call.1} parent=0
    #allocation2 [shape = 'u8[28672]{0}', space=vmem, size = 0x7000, scoped, tag = 'output window, operand 0, single buffered']
    #allocation3 [shape = 's32[1]{0}', space=sflag, size = 0x4, scoped, tag = 'scoped memory for tpu_custom_call.1']
    %22 = vsyncpa [#allocation3], 0
    // Predicated region
    $region2: #{tpu_custom_call.1} parent=1 // pred_check
      _
    $region3: #{tpu_custom_call.1} parent=1 // pred_check_branch
      %24 = sbr.rel (0) target = $region5
    $region4: #{tpu_custom_call.1} parent=1 // pred_region
      _
    $region5: #{tpu_custom_call.1} parent=1 // pred_fallthru
      _
    // Predicated region
    $region6: #{tpu_custom_call.1} parent=1 // pred_check
      _
    $region7: #{tpu_custom_call.1} parent=1 // pred_check_branch
      %26 = sbr.rel (0) target = $region9
    $region8: #{tpu_custom_call.1} parent=1 // pred_region
      _
    $region9: #{tpu_custom_call.1} parent=1 // pred_fallthru
      _
    // Predicated region
    $region10: #{tpu_custom_call.1} parent=1 // pred_check
      _
    $region11: #{tpu_custom_call.1} parent=1 // pred_check_branch
      %28 = sbr.rel (0) target = $region13
    $region12: #{tpu_custom_call.1} parent=1 // pred_region
      _
    $region13: #{tpu_custom_call.1} parent=1 // pred_fallthru
      _
    // Predicated region
    $region14: #{tpu_custom_call.1} parent=1 // pred_check
      _
    $region15: #{tpu_custom_call.1} parent=1 // pred_check_branch
      %30 = sbr.rel (0) target = $region17
    $region16: #{tpu_custom_call.1} parent=1 // pred_region
      _
    $region17: #{tpu_custom_call.1} parent=1 // pred_fallthru
      _
    // Predicated region
    $region18: #{tpu_custom_call.1} parent=1 // pred_check
      _
    $region19: #{tpu_custom_call.1} parent=1 // pred_check_branch
      %32 = sbr.rel (0) target = $region21
    $region20: #{tpu_custom_call.1} parent=1 // pred_region
      _
    $region21: #{tpu_custom_call.1} parent=1 // pred_fallthru
      _
    // Predicated region
    $region22: #{tpu_custom_call.1} parent=1 // pred_check
      _
    $region23: #{tpu_custom_call.1} parent=1 // pred_check_branch
      %34 = sbr.rel (0) target = $region25
    $region24: #{tpu_custom_call.1} parent=1 // pred_region
      _
    $region25: #{tpu_custom_call.1} parent=1 // pred_fallthru
      _
    // Predicated region
    $region26: #{tpu_custom_call.1} parent=1 // pred_check
      _
    $region27: #{tpu_custom_call.1} parent=1 // pred_check_branch
      %36 = sbr.rel (0) target = $region29
    $region28: #{tpu_custom_call.1} parent=1 // pred_region
      _
    $region29: #{tpu_custom_call.1} parent=1 // pred_fallthru
      _
    // Predicated region
    $region30: #{tpu_custom_call.1} parent=1 // pred_check
      _
    $region31: #{tpu_custom_call.1} parent=1 // pred_check_branch
      %38 = sbr.rel (0) target = $region33
    $region32: #{tpu_custom_call.1} parent=1 // pred_region
      _
    $region33: #{tpu_custom_call.1} parent=1 // pred_fallthru
      _
    // Predicated region
    $region34: #{tpu_custom_call.1} parent=1 // pred_check
      _
    $region35: #{tpu_custom_call.1} parent=1 // pred_check_branch
      %40 = sbr.rel (0) target = $region37
    $region36: #{tpu_custom_call.1} parent=1 // pred_region
      _
    $region37: #{tpu_custom_call.1} parent=1 // pred_fallthru
      _
    // Predicated region
    $region38: #{tpu_custom_call.1} parent=1 // pred_check
      _
    $region39: #{tpu_custom_call.1} parent=1 // pred_check_branch
      %42 = sbr.rel (0) target = $region41
    $region40: #{tpu_custom_call.1} parent=1 // pred_region
      _
    $region41: #{tpu_custom_call.1} parent=1 // pred_fallthru
      _
    // Predicated region
    $region42: #{tpu_custom_call.1} parent=1 // pred_check
      _
    $region43: #{tpu_custom_call.1} parent=1 // pred_check_branch
      %44 = sbr.rel (0) target = $region45
    $region44: #{tpu_custom_call.1} parent=1 // pred_region
      _
    $region45: #{tpu_custom_call.1} parent=1 // pred_fallthru
      _
    // Predicated region
    $region46: #{tpu_custom_call.1} parent=1 // pred_check
      _
    $region47: #{tpu_custom_call.1} parent=1 // pred_check_branch
      %46 = sbr.rel (0) target = $region49
    $region48: #{tpu_custom_call.1} parent=1 // pred_region
      _
    $region49: #{tpu_custom_call.1} parent=1 // pred_fallthru
      _
    // Predicated region
    $region50: #{tpu_custom_call.1} parent=1 // pred_check
      _
    $region51: #{tpu_custom_call.1} parent=1 // pred_check_branch
      %48 = sbr.rel (0) target = $region53
    $region52: #{tpu_custom_call.1} parent=1 // pred_region
      _
    $region53: #{tpu_custom_call.1} parent=1 // pred_fallthru
      _
    // Predicated region
    $region54: #{tpu_custom_call.1} parent=1 // pred_check
      _
    $region55: #{tpu_custom_call.1} parent=1 // pred_check_branch
      %50 = sbr.rel (0) target = $region57
    $region56: #{tpu_custom_call.1} parent=1 // pred_region
      _
    $region57: #{tpu_custom_call.1} parent=1 // pred_fallthru
      _
    // Predicated region
    $region58: #{tpu_custom_call.1} parent=1 // pred_check
      _
    $region59: #{tpu_custom_call.1} parent=1 // pred_check_branch
      %52 = sbr.rel (0) target = $region61
    $region60: #{tpu_custom_call.1} parent=1 // pred_region
      _
    $region61: #{tpu_custom_call.1} parent=1 // pred_fallthru
      _
    // Predicated region
    $region62: #{tpu_custom_call.1} parent=1 // pred_check
      _
    $region63: #{tpu_custom_call.1} parent=1 // pred_check_branch
      %54 = sbr.rel (0) target = $region65
    $region64: #{tpu_custom_call.1} parent=1 // pred_region
      _
    $region65: #{tpu_custom_call.1} parent=1 // pred_fallthru
      _
    // Predicated region
    $region66: #{tpu_custom_call.1} parent=1 // pred_check
      _
    $region67: #{tpu_custom_call.1} parent=1 // pred_check_branch
      %56 = sbr.rel (0) target = $region69
    $region68: #{tpu_custom_call.1} parent=1 // pred_region
      _
    $region69: #{tpu_custom_call.1} parent=1 // pred_fallthru
      _
    %v57 = vld [vmem:[%s0] sm:$0xff]
    %v58 = vld [vmem:[%s0 + $0x8] sm:$0xff]
    %v59 = vld [vmem:[%s0 + $0x10] sm:$0xff]
    %v60 = vld [vmem:[%s0 + $0x18] sm:$0xff]
    %v61 = vld [vmem:[%s0 + $0x20] sm:$0xff]
    %v62 = vld [vmem:[%s0 + $0x28] sm:$0xff]
    %v63 = vld [vmem:[%s0 + $0x30] sm:$0xff]
    %v64 = vld [vmem:[%s1] sm:$0xff]
    %v65 = vld [vmem:[%s1 + $0x8] sm:$0xff]
    %v66 = vld [vmem:[%s1 + $0x10] sm:$0xff]
    %v67 = vld [vmem:[%s1 + $0x18] sm:$0xff]
    %v68 = vld [vmem:[%s1 + $0x20] sm:$0xff]
    %v69 = vld [vmem:[%s1 + $0x28] sm:$0xff]
    %v70 = vld [vmem:[%s1 + $0x30] sm:$0xff]
    %v71 = vld [vmem:[%s1 + $0x38] sm:$0xff]
    %v72 = vld [vmem:[%s1 + $0x40] sm:$0xff]
    %v73 = vld [vmem:[%s1 + $0x48] sm:$0xff]
    %v74 = vld [vmem:[%s1 + $0x50] sm:$0xff]
    %v75 = vld [vmem:[%s1 + $0x58] sm:$0xff]
    %v76 = vld [vmem:[%s1 + $0x60] sm:$0xff]
    %v77 = vld [vmem:[%s1 + $0x68] sm:$0xff]
    %v78 = vld [vmem:[%s1 + $0x70] sm:$0xff]
    %v79 = vld [vmem:[%s1 + $0x78] sm:$0xff]
    %v80 = vld [vmem:[%s1 + $0x80] sm:$0xff]
    %v81 = vld [vmem:[%s1 + $0x88] sm:$0xff]
    %v82 = vld [vmem:[%s1 + $0x90] sm:$0xff]
    %v83 = vld [vmem:[%s1 + $0x98] sm:$0xff]
    %v84 = vld [vmem:[%s1 + $0xa0] sm:$0xff]
    %v85 = vld [vmem:[%s1 + $0xa8] sm:$0xff]
    %v86 = vld [vmem:[%s1 + $0xb0] sm:$0xff]
    %v87 = vld [vmem:[%s1 + $0xb8] sm:$0xff]
    %v88 = vld [vmem:[%s1 + $0xc0] sm:$0xff]
    %v89 = vld [vmem:[%s1 + $0xc8] sm:$0xff]
    %v90 = vld [vmem:[%s1 + $0xd0] sm:$0xff]
    %v91 = vld [vmem:[%s1 + $0xd8] sm:$0xff]
    %v92 = vld [vmem:[%s1 + $0xe0] sm:$0xff]
    %v93 = vld [vmem:[%s1 + $0xe8] sm:$0xff]
    %v94 = vld [vmem:[%s1 + $0xf0] sm:$0xff]
    %v95 = vld [vmem:[%s1 + $0xf8] sm:$0xff]
    %v96 = vld [vmem:[%s1 + $0x100] sm:$0xff]
    %v97 = vld [vmem:[%s1 + $0x108] sm:$0xff]
    %v98 = vld [vmem:[%s1 + $0x110] sm:$0xff]
    %v99 = vld [vmem:[%s1 + $0x118] sm:$0xff]
    %v100 = vld [vmem:[%s1 + $0x120] sm:$0xff]
    %v101 = vld [vmem:[%s1 + $0x128] sm:$0xff]
    %v102 = vld [vmem:[%s1 + $0x130] sm:$0xff]
    %v103 = vld [vmem:[%s1 + $0x138] sm:$0xff]
    %v104 = vld [vmem:[%s1 + $0x140] sm:$0xff]
    %v105 = vld [vmem:[%s1 + $0x148] sm:$0xff]
    %v106 = vld [vmem:[%s1 + $0x150] sm:$0xff]
    %v107 = vld [vmem:[%s1 + $0x158] sm:$0xff]
    %v108 = vld [vmem:[%s1 + $0x160] sm:$0xff]
    %v109 = vld [vmem:[%s1 + $0x168] sm:$0xff]
    %v110 = vld [vmem:[%s1 + $0x170] sm:$0xff]
    %v111 = vld [vmem:[%s1 + $0x178] sm:$0xff]
    %v112 = vld [vmem:[%s1 + $0x180] sm:$0xff]
    %v113 = vld [vmem:[%s1 + $0x188] sm:$0xff]
    %v114 = vld [vmem:[%s1 + $0x190] sm:$0xff]
    %v115 = vld [vmem:[%s1 + $0x198] sm:$0xff]
    %v116 = vld [vmem:[%s1 + $0x1a0] sm:$0xff]
    %v117 = vld [vmem:[%s1 + $0x1a8] sm:$0xff]
    %v118 = vld [vmem:[%s1 + $0x1b0] sm:$0xff]
    %v119 = vld [vmem:[%s1 + $0x1b8] sm:$0xff]
    %v120 = vld [vmem:[%s1 + $0x1c0] sm:$0xff]
    %v121 = vld [vmem:[%s1 + $0x1c8] sm:$0xff]
    %v122 = vld [vmem:[%s1 + $0x1d0] sm:$0xff]
    %v123 = vld [vmem:[%s1 + $0x1d8] sm:$0xff]
    %v124 = vld [vmem:[%s1 + $0x1e0] sm:$0xff]
    %v125 = vld [vmem:[%s1 + $0x1e8] sm:$0xff]
    %v126 = vld [vmem:[%s1 + $0x1f0] sm:$0xff]
    %v127 = vld [vmem:[%s1 + $0x1f8] sm:$0xff]
    %v128 = vld [vmem:[%s1 + $0x200] sm:$0xff]
    %v129 = vld [vmem:[%s1 + $0x208] sm:$0xff]
    %v130 = vld [vmem:[%s1 + $0x210] sm:$0xff]
    %v131 = vld [vmem:[%s1 + $0x218] sm:$0xff]
    %v132 = vld [vmem:[%s1 + $0x220] sm:$0xff]
    %v133 = vld [vmem:[%s1 + $0x228] sm:$0xff]
    %v134 = vld [vmem:[%s1 + $0x230] sm:$0xff]
    %v135 = vld [vmem:[%s1 + $0x238] sm:$0xff]
    %v136 = vld [vmem:[%s1 + $0x240] sm:$0xff]
    %v137 = vld [vmem:[%s1 + $0x248] sm:$0xff]
    %v138 = vld [vmem:[%s1 + $0x250] sm:$0xff]
    %v139 = vld [vmem:[%s1 + $0x258] sm:$0xff]
    %v140 = vld [vmem:[%s1 + $0x260] sm:$0xff]
    %v141 = vld [vmem:[%s1 + $0x268] sm:$0xff]
    %v142 = vld [vmem:[%s1 + $0x270] sm:$0xff]
    %v143 = vld [vmem:[%s1 + $0x278] sm:$0xff]
    %v144 = vld [vmem:[%s1 + $0x280] sm:$0xff]
    %v145 = vld [vmem:[%s1 + $0x288] sm:$0xff]
    %v146 = vld [vmem:[%s1 + $0x290] sm:$0xff]
    %v147 = vld [vmem:[%s1 + $0x298] sm:$0xff]
    %v148 = vld [vmem:[%s1 + $0x2a0] sm:$0xff]
    %v149 = vld [vmem:[%s1 + $0x2a8] sm:$0xff]
    %v150 = vld [vmem:[%s1 + $0x2b0] sm:$0xff]
    %v151 = vld [vmem:[%s1 + $0x2b8] sm:$0xff]
    %v152 = vld [vmem:[%s1 + $0x2c0] sm:$0xff]
    %v153 = vld [vmem:[%s1 + $0x2c8] sm:$0xff]
    %v154 = vld [vmem:[%s1 + $0x2d0] sm:$0xff]
    %v155 = vld [vmem:[%s1 + $0x2d8] sm:$0xff]
    %v156 = vld [vmem:[%s1 + $0x2e0] sm:$0xff]
    %v157 = vld [vmem:[%s1 + $0x2e8] sm:$0xff]
    %v158 = vld [vmem:[%s1 + $0x2f0] sm:$0xff]
    %v159 = vld [vmem:[%s1 + $0x2f8] sm:$0xff]
    %v160 = vld [vmem:[%s1 + $0x300] sm:$0xff]
    %v161 = vld [vmem:[%s1 + $0x308] sm:$0xff]
    %v162 = vld [vmem:[%s2] sm:$0x1]
    %v164 = vlaneseq
    %v165 = vshrl.u32 %v164, 7
    %v166 = vsub.s32 0, %v165
    %v167 = vrot.slane %v162, %v166
    %vm169 = vcmask 130048
    %v171 = vsel %vm169, %v63, 0
    %173 = vmatprep.subr.mxu0 0.0
    %174 = vmatpush1.msra.mxu0 %v64
    %175 = vmatprep.subr.mxu0 0.0
    %176 = vmatpush1.msra.mxu0 %v65
    %177 = vmatprep.subr.mxu0 0.0
    %178 = vmatpush1.msra.mxu0 %v66
    %179 = vmatprep.subr.mxu0 0.0
    %180 = vmatpush1.msra.mxu0 %v67
    %181 = vmatprep.subr.mxu0 0.0
    %182 = vmatpush1.msra.mxu0 %v68
    %183 = vmatprep.subr.mxu0 0.0
    %184 = vmatpush1.msra.mxu0 %v69
    %185 = vmatprep.subr.mxu0 0.0
    %186 = vmatpush1.msra.mxu0 %v70
    %187 = vmatprep.subr.mxu0 0.0
    %188 = vmatpush1.msra.mxu0 %v71
    %189 = vmatprep.subr.mxu0 0.0
    %190 = vmatpush1.msra.mxu0 %v72
    %191 = vmatprep.subr.mxu0 0.0
    %192 = vmatpush1.msra.mxu0 %v73
    %193 = vmatprep.subr.mxu0 0.0
    %194 = vmatpush1.msra.mxu0 %v74
    %195 = vmatprep.subr.mxu0 0.0
    %196 = vmatpush1.msra.mxu0 %v75
    %197 = vmatprep.subr.mxu0 0.0
    %198 = vmatpush1.msra.mxu0 %v76
    %199 = vmatprep.subr.mxu0 0.0
    %200 = vmatpush1.msra.mxu0 %v77
    %201 = vmatprep.subr.mxu0 0.0
    %202 = vmatpush1.msra.mxu0 %v78
    %203 = vmatprep.subr.mxu0 0.0
    %204 = vmatpush1.msra.mxu0 %v79
    %205 = vmatprep.subr.mxu0 0.0
    %206 = vmatpush1.msra.mxu0 %v80
    %207 = vmatprep.subr.mxu0 0.0
    %208 = vmatpush1.msra.mxu0 %v81
    %209 = vmatprep.subr.mxu0 0.0
    %210 = vmatpush1.msra.mxu0 %v82
    %211 = vmatprep.subr.mxu0 0.0
    %212 = vmatpush1.msra.mxu0 %v83
    %213 = vmatprep.subr.mxu0 0.0
    %214 = vmatpush1.msra.mxu0 %v84
    %215 = vmatprep.subr.mxu0 0.0
    %216 = vmatpush1.msra.mxu0 %v85
    %217 = vmatprep.subr.mxu0 0.0
    %218 = vmatpush1.msra.mxu0 %v86
    %219 = vmatprep.subr.mxu0 0.0
    %220 = vmatpush1.msra.mxu0 %v87
    %221 = vmatprep.subr.mxu0 0.0
    %222 = vmatpush1.msra.mxu0 %v88
    %223 = vmatprep.subr.mxu0 0.0
    %224 = vmatpush1.msra.mxu0 %v89
    %225 = vmatprep.subr.mxu0 0.0
    %226 = vmatpush1.msra.mxu0 %v90
    %227 = vmatprep.subr.mxu0 0.0
    %228 = vmatpush1.msra.mxu0 %v91
    %229 = vmatprep.subr.mxu0 0.0
    %230 = vmatpush1.msra.mxu0 %v92
    %231 = vmatprep.subr.mxu0 0.0
    %232 = vmatpush1.msra.mxu0 %v93
    %233 = vmatprep.subr.mxu0 0.0
    %234 = vmatpush1.msra.mxu0 %v94
    %235 = vmatprep.subr.mxu0 0.0
    %236 = vmatpush1.msra.mxu0 %v95
    %237 = vmatprep.mubr.f32.mxu0 %v58
    %238 = vmatmul.mubr.f32.gmra.mrb[0].mxu0 %v57
    %v239 = vpop.f32.mrb[0].mxu0
    %v240 = vadd.f32 %v167, %v239
    %v241 = vpop.f32.mrb[0].mxu0
    %242 = vdwg.mxu0
    %243 = vmatprep.subr.mxu0 0.0
    %244 = vmatpush1.msra.mxu0 %v96
    %245 = vmatprep.subr.mxu0 0.0
    %246 = vmatpush1.msra.mxu0 %v97
    %247 = vmatprep.subr.mxu0 0.0
    %248 = vmatpush1.msra.mxu0 %v98
    %249 = vmatprep.subr.mxu0 0.0
    %250 = vmatpush1.msra.mxu0 %v99
    %251 = vmatprep.subr.mxu0 0.0
    %252 = vmatpush1.msra.mxu0 %v100
    %253 = vmatprep.subr.mxu0 0.0
    %254 = vmatpush1.msra.mxu0 %v101
    %255 = vmatprep.subr.mxu0 0.0
    %256 = vmatpush1.msra.mxu0 %v102
    %257 = vmatprep.subr.mxu0 0.0
    %258 = vmatpush1.msra.mxu0 %v103
    %259 = vmatprep.subr.mxu0 0.0
    %260 = vmatpush1.msra.mxu0 %v104
    %261 = vmatprep.subr.mxu0 0.0
    %262 = vmatpush1.msra.mxu0 %v105
    %263 = vmatprep.subr.mxu0 0.0
    %264 = vmatpush1.msra.mxu0 %v106
    %265 = vmatprep.subr.mxu0 0.0
    %266 = vmatpush1.msra.mxu0 %v107
    %267 = vmatprep.subr.mxu0 0.0
    %268 = vmatpush1.msra.mxu0 %v108
    %269 = vmatprep.subr.mxu0 0.0
    %270 = vmatpush1.msra.mxu0 %v109
    %271 = vmatprep.subr.mxu0 0.0
    %272 = vmatpush1.msra.mxu0 %v110
    %273 = vmatprep.subr.mxu0 0.0
    %274 = vmatpush1.msra.mxu0 %v111
    %275 = vmatprep.subr.mxu0 0.0
    %276 = vmatpush1.msra.mxu0 %v112
    %277 = vmatprep.subr.mxu0 0.0
    %278 = vmatpush1.msra.mxu0 %v113
    %279 = vmatprep.subr.mxu0 0.0
    %280 = vmatpush1.msra.mxu0 %v114
    %281 = vmatprep.subr.mxu0 0.0
    %282 = vmatpush1.msra.mxu0 %v115
    %283 = vmatprep.subr.mxu0 0.0
    %284 = vmatpush1.msra.mxu0 %v116
    %285 = vmatprep.subr.mxu0 0.0
    %286 = vmatpush1.msra.mxu0 %v117
    %287 = vmatprep.subr.mxu0 0.0
    %288 = vmatpush1.msra.mxu0 %v118
    %289 = vmatprep.subr.mxu0 0.0
    %290 = vmatpush1.msra.mxu0 %v119
    %291 = vmatprep.subr.mxu0 0.0
    %292 = vmatpush1.msra.mxu0 %v120
    %293 = vmatprep.subr.mxu0 0.0
    %294 = vmatpush1.msra.mxu0 %v121
    %295 = vmatprep.subr.mxu0 0.0
    %296 = vmatpush1.msra.mxu0 %v122
    %297 = vmatprep.subr.mxu0 0.0
    %298 = vmatpush1.msra.mxu0 %v123
    %299 = vmatprep.subr.mxu0 0.0
    %300 = vmatpush1.msra.mxu0 %v124
    %301 = vmatprep.subr.mxu0 0.0
    %302 = vmatpush1.msra.mxu0 %v125
    %303 = vmatprep.subr.mxu0 0.0
    %304 = vmatpush1.msra.mxu0 %v126
    %305 = vmatprep.subr.mxu0 0.0
    %306 = vmatpush1.msra.mxu0 %v127
    %307 = vmatprep.mubr.f32.mxu0 %v60
    %308 = vmatmul.mubr.f32.gmra.mrb[0].mxu0 %v59
    %v309 = vpop.f32.mrb[0].mxu0
    %v310 = vadd.f32 %v240, %v309
    %v311 = vpop.f32.mrb[0].mxu0
    %312 = vdwg.mxu0
    %313 = vmatprep.subr.mxu0 0.0
    %314 = vmatpush1.msra.mxu0 %v128
    %315 = vmatprep.subr.mxu0 0.0
    %316 = vmatpush1.msra.mxu0 %v129
    %317 = vmatprep.subr.mxu0 0.0
    %318 = vmatpush1.msra.mxu0 %v130
    %319 = vmatprep.subr.mxu0 0.0
    %320 = vmatpush1.msra.mxu0 %v131
    %321 = vmatprep.subr.mxu0 0.0
    %322 = vmatpush1.msra.mxu0 %v132
    %323 = vmatprep.subr.mxu0 0.0
    %324 = vmatpush1.msra.mxu0 %v133
    %325 = vmatprep.subr.mxu0 0.0
    %326 = vmatpush1.msra.mxu0 %v134
    %327 = vmatprep.subr.mxu0 0.0
    %328 = vmatpush1.msra.mxu0 %v135
    %329 = vmatprep.subr.mxu0 0.0
    %330 = vmatpush1.msra.mxu0 %v136
    %331 = vmatprep.subr.mxu0 0.0
    %332 = vmatpush1.msra.mxu0 %v137
    %333 = vmatprep.subr.mxu0 0.0
    %334 = vmatpush1.msra.mxu0 %v138
    %335 = vmatprep.subr.mxu0 0.0
    %336 = vmatpush1.msra.mxu0 %v139
    %337 = vmatprep.subr.mxu0 0.0
    %338 = vmatpush1.msra.mxu0 %v140
    %339 = vmatprep.subr.mxu0 0.0
    %340 = vmatpush1.msra.mxu0 %v141
    %341 = vmatprep.subr.mxu0 0.0
    %342 = vmatpush1.msra.mxu0 %v142
    %343 = vmatprep.subr.mxu0 0.0
    %344 = vmatpush1.msra.mxu0 %v143
    %345 = vmatprep.subr.mxu0 0.0
    %346 = vmatpush1.msra.mxu0 %v144
    %347 = vmatprep.subr.mxu0 0.0
    %348 = vmatpush1.msra.mxu0 %v145
    %349 = vmatprep.subr.mxu0 0.0
    %350 = vmatpush1.msra.mxu0 %v146
    %351 = vmatprep.subr.mxu0 0.0
    %352 = vmatpush1.msra.mxu0 %v147
    %353 = vmatprep.subr.mxu0 0.0
    %354 = vmatpush1.msra.mxu0 %v148
    %355 = vmatprep.subr.mxu0 0.0
    %356 = vmatpush1.msra.mxu0 %v149
    %357 = vmatprep.subr.mxu0 0.0
    %358 = vmatpush1.msra.mxu0 %v150
    %359 = vmatprep.subr.mxu0 0.0
    %360 = vmatpush1.msra.mxu0 %v151
    %361 = vmatprep.subr.mxu0 0.0
    %362 = vmatpush1.msra.mxu0 %v152
    %363 = vmatprep.subr.mxu0 0.0
    %364 = vmatpush1.msra.mxu0 %v153
    %365 = vmatprep.subr.mxu0 0.0
    %366 = vmatpush1.msra.mxu0 %v154
    %367 = vmatprep.subr.mxu0 0.0
    %368 = vmatpush1.msra.mxu0 %v155
    %369 = vmatprep.subr.mxu0 0.0
    %370 = vmatpush1.msra.mxu0 %v156
    %371 = vmatprep.subr.mxu0 0.0
    %372 = vmatpush1.msra.mxu0 %v157
    %373 = vmatprep.subr.mxu0 0.0
    %374 = vmatpush1.msra.mxu0 %v158
    %375 = vmatprep.subr.mxu0 0.0
    %376 = vmatpush1.msra.mxu0 %v159
    %377 = vmatprep.mubr.f32.mxu0 %v62
    %378 = vmatmul.mubr.f32.gmra.mrb[0].mxu0 %v61
    %v379 = vpop.f32.mrb[0].mxu0
    %v380 = vadd.f32 %v310, %v379
    %v381 = vpop.f32.mrb[0].mxu0
    %382 = vdwg.mxu0
    %383 = vmatprep.subr.mxu0 0.0
    %384 = vmatpush1.msra.mxu0 %v160
    %385 = vmatprep.subr.mxu0 0.0
    %386 = vmatpush1.msra.mxu0 %v161
    %387 = vmatprep.subr.mxu0 0.0
    %388 = vmatpush1.msra.mxu0 0.0
    %389 = vmatprep.subr.mxu0 0.0
    %390 = vmatpush1.msra.mxu0 0.0
    %391 = vmatprep.subr.mxu0 0.0
    %392 = vmatpush1.msra.mxu0 0.0
    %393 = vmatprep.subr.mxu0 0.0
    %394 = vmatpush1.msra.mxu0 0.0
    %395 = vmatprep.subr.mxu0 0.0
    %396 = vmatpush1.msra.mxu0 0.0
    %397 = vmatprep.subr.mxu0 0.0
    %398 = vmatpush1.msra.mxu0 0.0
    %399 = vmatprep.subr.mxu0 0.0
    %400 = vmatpush1.msra.mxu0 0.0
    %401 = vmatprep.subr.mxu0 0.0
    %402 = vmatpush1.msra.mxu0 0.0
    %403 = vmatprep.subr.mxu0 0.0
    %404 = vmatpush1.msra.mxu0 0.0
    %405 = vmatprep.subr.mxu0 0.0
    %406 = vmatpush1.msra.mxu0 0.0
    %407 = vmatprep.subr.mxu0 0.0
    %408 = vmatpush1.msra.mxu0 0.0
    %409 = vmatprep.subr.mxu0 0.0
    %410 = vmatpush1.msra.mxu0 0.0
    %411 = vmatprep.subr.mxu0 0.0
    %412 = vmatpush1.msra.mxu0 0.0
    %413 = vmatprep.subr.mxu0 0.0
    %414 = vmatpush1.msra.mxu0 0.0
    %415 = vmatprep.subr.mxu0 0.0
    %416 = vmatpush1.msra.mxu0 0.0
    %417 = vmatprep.subr.mxu0 0.0
    %418 = vmatpush1.msra.mxu0 0.0
    %419 = vmatprep.subr.mxu0 0.0
    %420 = vmatpush1.msra.mxu0 0.0
    %421 = vmatprep.subr.mxu0 0.0
    %422 = vmatpush1.msra.mxu0 0.0
    %423 = vmatprep.subr.mxu0 0.0
    %424 = vmatpush1.msra.mxu0 0.0
    %425 = vmatprep.subr.mxu0 0.0
    %426 = vmatpush1.msra.mxu0 0.0
    %427 = vmatprep.subr.mxu0 0.0
    %428 = vmatpush1.msra.mxu0 0.0
    %429 = vmatprep.subr.mxu0 0.0
    %430 = vmatpush1.msra.mxu0 0.0
    %431 = vmatprep.subr.mxu0 0.0
    %432 = vmatpush1.msra.mxu0 0.0
    %433 = vmatprep.subr.mxu0 0.0
    %434 = vmatpush1.msra.mxu0 0.0
    %435 = vmatprep.subr.mxu0 0.0
    %436 = vmatpush1.msra.mxu0 0.0
    %437 = vmatprep.subr.mxu0 0.0
    %438 = vmatpush1.msra.mxu0 0.0
    %439 = vmatprep.subr.mxu0 0.0
    %440 = vmatpush1.msra.mxu0 0.0
    %441 = vmatprep.subr.mxu0 0.0
    %442 = vmatpush1.msra.mxu0 0.0
    %443 = vmatprep.subr.mxu0 0.0
    %444 = vmatpush1.msra.mxu0 0.0
    %445 = vmatprep.subr.mxu0 0.0
    %446 = vmatpush1.msra.mxu0 0.0
    %447 = vmatprep.mubr.f32.mxu0 0.0
    %448 = vmatmul.mubr.f32.gmra.mrb[0].mxu0 %v171
    %v449 = vpop.f32.mrb[0].mxu0
    %v450 = vadd.f32 %v380, %v449
    %v451 = vpop.f32.mrb[0].mxu0
    %452 = vdwg.mxu0
    %v453 = vmax.f32 %v450, 0.0
    %v454 = vld [vmem:[%s3] sm:$0xff]
    %v455 = vld [vmem:[%s3 + $0x8] sm:$0xff]
    %v456 = vld [vmem:[%s3 + $0x10] sm:$0xff]
    %v457 = vld [vmem:[%s3 + $0x18] sm:$0xff]
    %v458 = vld [vmem:[%s3 + $0x20] sm:$0xff]
    %v459 = vld [vmem:[%s3 + $0x28] sm:$0xff]
    %v460 = vld [vmem:[%s3 + $0x30] sm:$0xff]
    %v461 = vld [vmem:[%s3 + $0x38] sm:$0xff]
    %v462 = vld [vmem:[%s3 + $0x40] sm:$0xff]
    %v463 = vld [vmem:[%s3 + $0x48] sm:$0xff]
    %v464 = vld [vmem:[%s3 + $0x50] sm:$0xff]
    %v465 = vld [vmem:[%s3 + $0x58] sm:$0xff]
    %v466 = vld [vmem:[%s3 + $0x60] sm:$0xff]
    %v467 = vld [vmem:[%s3 + $0x68] sm:$0xff]
    %v468 = vld [vmem:[%s3 + $0x70] sm:$0xff]
    %v469 = vld [vmem:[%s3 + $0x78] sm:$0xff]
    %v470 = vld [vmem:[%s4] sm:$0x1]
    %v472 = vlaneseq
    %v473 = vshrl.u32 %v472, 7
    %v474 = vsub.s32 0, %v473
    %v475 = vrot.slane %v470, %v474
    %477 = vmatprep.subr.mxu0 0.0
    %478 = vmatpush1.msra.mxu0 %v454
    %479 = vmatprep.subr.mxu0 0.0
    %480 = vmatpush1.msra.mxu0 %v455
    %481 = vmatprep.subr.mxu0 0.0
    %482 = vmatpush1.msra.mxu0 %v456
    %483 = vmatprep.subr.mxu0 0.0
    %484 = vmatpush1.msra.mxu0 %v457
    %485 = vmatprep.subr.mxu0 0.0
    %486 = vmatpush1.msra.mxu0 %v458
    %487 = vmatprep.subr.mxu0 0.0
    %488 = vmatpush1.msra.mxu0 %v459
    %489 = vmatprep.subr.mxu0 0.0
    %490 = vmatpush1.msra.mxu0 %v460
    %491 = vmatprep.subr.mxu0 0.0
    %492 = vmatpush1.msra.mxu0 %v461
    %493 = vmatprep.subr.mxu0 0.0
    %494 = vmatpush1.msra.mxu0 %v462
    %495 = vmatprep.subr.mxu0 0.0
    %496 = vmatpush1.msra.mxu0 %v463
    %497 = vmatprep.subr.mxu0 0.0
    %498 = vmatpush1.msra.mxu0 %v464
    %499 = vmatprep.subr.mxu0 0.0
    %500 = vmatpush1.msra.mxu0 %v465
    %501 = vmatprep.subr.mxu0 0.0
    %502 = vmatpush1.msra.mxu0 %v466
    %503 = vmatprep.subr.mxu0 0.0
    %504 = vmatpush1.msra.mxu0 %v467
    %505 = vmatprep.subr.mxu0 0.0
    %506 = vmatpush1.msra.mxu0 %v468
    %507 = vmatprep.subr.mxu0 0.0
    %508 = vmatpush1.msra.mxu0 %v469
    %509 = vmatprep.subr.mxu0 0.0
    %510 = vmatpush1.msra.mxu0 0.0
    %511 = vmatprep.subr.mxu0 0.0
    %512 = vmatpush1.msra.mxu0 0.0
    %513 = vmatprep.subr.mxu0 0.0
    %514 = vmatpush1.msra.mxu0 0.0
    %515 = vmatprep.subr.mxu0 0.0
    %516 = vmatpush1.msra.mxu0 0.0
    %517 = vmatprep.subr.mxu0 0.0
    %518 = vmatpush1.msra.mxu0 0.0
    %519 = vmatprep.subr.mxu0 0.0
    %520 = vmatpush1.msra.mxu0 0.0
    %521 = vmatprep.subr.mxu0 0.0
    %522 = vmatpush1.msra.mxu0 0.0
    %523 = vmatprep.subr.mxu0 0.0
    %524 = vmatpush1.msra.mxu0 0.0
    %525 = vmatprep.subr.mxu0 0.0
    %526 = vmatpush1.msra.mxu0 0.0
    %527 = vmatprep.subr.mxu0 0.0
    %528 = vmatpush1.msra.mxu0 0.0
    %529 = vmatprep.subr.mxu0 0.0
    %530 = vmatpush1.msra.mxu0 0.0
    %531 = vmatprep.subr.mxu0 0.0
    %532 = vmatpush1.msra.mxu0 0.0
    %533 = vmatprep.subr.mxu0 0.0
    %534 = vmatpush1.msra.mxu0 0.0
    %535 = vmatprep.subr.mxu0 0.0
    %536 = vmatpush1.msra.mxu0 0.0
    %537 = vmatprep.subr.mxu0 0.0
    %538 = vmatpush1.msra.mxu0 0.0
    %539 = vmatprep.subr.mxu0 0.0
    %540 = vmatpush1.msra.mxu0 0.0
    %541 = vmatprep.mubr.f32.mxu0 0.0
    %542 = vmatmul.mubr.f32.gmra.mrb[0].mxu0 %v453
    %v543 = vpop.f32.mrb[0].mxu0
    %v544 = vadd.f32 %v475, %v543
    %v545 = vpop.f32.mrb[0].mxu0
    %546 = vdwg.mxu0
    %v547 = vmax.f32 %v544, 0.0
    %v548 = vld [vmem:[%s5] sm:$0xff]
    %v549 = vld [vmem:[%s5 + $0x8] sm:$0xff]
    %v550 = vld [vmem:[%s5 + $0x10] sm:$0xff]
    %v551 = vld [vmem:[%s5 + $0x18] sm:$0xff]
    %v552 = vld [vmem:[%s5 + $0x20] sm:$0xff]
    %v553 = vld [vmem:[%s5 + $0x28] sm:$0xff]
    %v554 = vld [vmem:[%s5 + $0x30] sm:$0xff]
    %v555 = vld [vmem:[%s5 + $0x38] sm:$0xff]
    %v556 = vld [vmem:[%s5 + $0x40] sm:$0xff]
    %v557 = vld [vmem:[%s5 + $0x48] sm:$0xff]
    %v558 = vld [vmem:[%s5 + $0x50] sm:$0xff]
    %v559 = vld [vmem:[%s5 + $0x58] sm:$0xff]
    %v560 = vld [vmem:[%s5 + $0x60] sm:$0xff]
    %v561 = vld [vmem:[%s5 + $0x68] sm:$0xff]
    %v562 = vld [vmem:[%s5 + $0x70] sm:$0xff]
    %v563 = vld [vmem:[%s5 + $0x78] sm:$0xff]
    %v564 = vld [vmem:[%s6] sm:$0x1]
    %v566 = vlaneseq
    %v567 = vshrl.u32 %v566, 7
    %v568 = vsub.s32 0, %v567
    %v569 = vrot.slane %v564, %v568
    %571 = vmatprep.subr.mxu0 0.0
    %572 = vmatpush1.msra.mxu0 %v548
    %573 = vmatprep.subr.mxu0 0.0
    %574 = vmatpush1.msra.mxu0 %v549
    %575 = vmatprep.subr.mxu0 0.0
    %576 = vmatpush1.msra.mxu0 %v550
    %577 = vmatprep.subr.mxu0 0.0
    %578 = vmatpush1.msra.mxu0 %v551
    %579 = vmatprep.subr.mxu0 0.0
    %580 = vmatpush1.msra.mxu0 %v552
    %581 = vmatprep.subr.mxu0 0.0
    %582 = vmatpush1.msra.mxu0 %v553
    %583 = vmatprep.subr.mxu0 0.0
    %584 = vmatpush1.msra.mxu0 %v554
    %585 = vmatprep.subr.mxu0 0.0
    %586 = vmatpush1.msra.mxu0 %v555
    %587 = vmatprep.subr.mxu0 0.0
    %588 = vmatpush1.msra.mxu0 %v556
    %589 = vmatprep.subr.mxu0 0.0
    %590 = vmatpush1.msra.mxu0 %v557
    %591 = vmatprep.subr.mxu0 0.0
    %592 = vmatpush1.msra.mxu0 %v558
    %593 = vmatprep.subr.mxu0 0.0
    %594 = vmatpush1.msra.mxu0 %v559
    %595 = vmatprep.subr.mxu0 0.0
    %596 = vmatpush1.msra.mxu0 %v560
    %597 = vmatprep.subr.mxu0 0.0
    %598 = vmatpush1.msra.mxu0 %v561
    %599 = vmatprep.subr.mxu0 0.0
    %600 = vmatpush1.msra.mxu0 %v562
    %601 = vmatprep.subr.mxu0 0.0
    %602 = vmatpush1.msra.mxu0 %v563
    %603 = vmatprep.subr.mxu0 0.0
    %604 = vmatpush1.msra.mxu0 0.0
    %605 = vmatprep.subr.mxu0 0.0
    %606 = vmatpush1.msra.mxu0 0.0
    %607 = vmatprep.subr.mxu0 0.0
    %608 = vmatpush1.msra.mxu0 0.0
    %609 = vmatprep.subr.mxu0 0.0
    %610 = vmatpush1.msra.mxu0 0.0
    %611 = vmatprep.subr.mxu0 0.0
    %612 = vmatpush1.msra.mxu0 0.0
    %613 = vmatprep.subr.mxu0 0.0
    %614 = vmatpush1.msra.mxu0 0.0
    %615 = vmatprep.subr.mxu0 0.0
    %616 = vmatpush1.msra.mxu0 0.0
    %617 = vmatprep.subr.mxu0 0.0
    %618 = vmatpush1.msra.mxu0 0.0
    %619 = vmatprep.subr.mxu0 0.0
    %620 = vmatpush1.msra.mxu0 0.0
    %621 = vmatprep.subr.mxu0 0.0
    %622 = vmatpush1.msra.mxu0 0.0
    %623 = vmatprep.subr.mxu0 0.0
    %624 = vmatpush1.msra.mxu0 0.0
    %625 = vmatprep.subr.mxu0 0.0
    %626 = vmatpush1.msra.mxu0 0.0
    %627 = vmatprep.subr.mxu0 0.0
    %628 = vmatpush1.msra.mxu0 0.0
    %629 = vmatprep.subr.mxu0 0.0
    %630 = vmatpush1.msra.mxu0 0.0
    %631 = vmatprep.subr.mxu0 0.0
    %632 = vmatpush1.msra.mxu0 0.0
    %633 = vmatprep.subr.mxu0 0.0
    %634 = vmatpush1.msra.mxu0 0.0
    %635 = vmatprep.mubr.f32.mxu0 0.0
    %636 = vmatmul.mubr.f32.gmra.mrb[0].mxu0 %v547
    %v637 = vpop.f32.mrb[0].mxu0
    %v638 = vadd.f32 %v569, %v637
    %v639 = vpop.f32.mrb[0].mxu0
    %640 = vdwg.mxu0
    %v641 = vmax.f32 %v638, 0.0
    %v642 = vld [vmem:[%s7] sm:$0xff]
    %v643 = vld [vmem:[%s7 + $0x8] sm:$0xff]
    %v644 = vld [vmem:[%s7 + $0x10] sm:$0xff]
    %v645 = vld [vmem:[%s7 + $0x18] sm:$0xff]
    %v646 = vld [vmem:[%s7 + $0x20] sm:$0xff]
    %v647 = vld [vmem:[%s7 + $0x28] sm:$0xff]
    %v648 = vld [vmem:[%s7 + $0x30] sm:$0xff]
    %v649 = vld [vmem:[%s7 + $0x38] sm:$0xff]
    %v650 = vld [vmem:[%s7 + $0x40] sm:$0xff]
    %v651 = vld [vmem:[%s7 + $0x48] sm:$0xff]
    %v652 = vld [vmem:[%s7 + $0x50] sm:$0xff]
    %v653 = vld [vmem:[%s7 + $0x58] sm:$0xff]
    %v654 = vld [vmem:[%s7 + $0x60] sm:$0xff]
    %v655 = vld [vmem:[%s7 + $0x68] sm:$0xff]
    %v656 = vld [vmem:[%s7 + $0x70] sm:$0xff]
    %v657 = vld [vmem:[%s7 + $0x78] sm:$0xff]
    %v658 = vld [vmem:[%s8] sm:$0x1]
    %v660 = vlaneseq
    %v661 = vshrl.u32 %v660, 7
    %v662 = vsub.s32 0, %v661
    %v663 = vrot.slane %v658, %v662
    %665 = vmatprep.subr.mxu0 0.0
    %666 = vmatpush1.msra.mxu0 %v642
    %667 = vmatprep.subr.mxu0 0.0
    %668 = vmatpush1.msra.mxu0 %v643
    %669 = vmatprep.subr.mxu0 0.0
    %670 = vmatpush1.msra.mxu0 %v644
    %671 = vmatprep.subr.mxu0 0.0
    %672 = vmatpush1.msra.mxu0 %v645
    %673 = vmatprep.subr.mxu0 0.0
    %674 = vmatpush1.msra.mxu0 %v646
    %675 = vmatprep.subr.mxu0 0.0
    %676 = vmatpush1.msra.mxu0 %v647
    %677 = vmatprep.subr.mxu0 0.0
    %678 = vmatpush1.msra.mxu0 %v648
    %679 = vmatprep.subr.mxu0 0.0
    %680 = vmatpush1.msra.mxu0 %v649
    %681 = vmatprep.subr.mxu0 0.0
    %682 = vmatpush1.msra.mxu0 %v650
    %683 = vmatprep.subr.mxu0 0.0
    %684 = vmatpush1.msra.mxu0 %v651
    %685 = vmatprep.subr.mxu0 0.0
    %686 = vmatpush1.msra.mxu0 %v652
    %687 = vmatprep.subr.mxu0 0.0
    %688 = vmatpush1.msra.mxu0 %v653
    %689 = vmatprep.subr.mxu0 0.0
    %690 = vmatpush1.msra.mxu0 %v654
    %691 = vmatprep.subr.mxu0 0.0
    %692 = vmatpush1.msra.mxu0 %v655
    %693 = vmatprep.subr.mxu0 0.0
    %694 = vmatpush1.msra.mxu0 %v656
    %695 = vmatprep.subr.mxu0 0.0
    %696 = vmatpush1.msra.mxu0 %v657
    %697 = vmatprep.subr.mxu0 0.0
    %698 = vmatpush1.msra.mxu0 0.0
    %699 = vmatprep.subr.mxu0 0.0
    %700 = vmatpush1.msra.mxu0 0.0
    %701 = vmatprep.subr.mxu0 0.0
    %702 = vmatpush1.msra.mxu0 0.0
    %703 = vmatprep.subr.mxu0 0.0
    %704 = vmatpush1.msra.mxu0 0.0
    %705 = vmatprep.subr.mxu0 0.0
    %706 = vmatpush1.msra.mxu0 0.0
    %707 = vmatprep.subr.mxu0 0.0
    %708 = vmatpush1.msra.mxu0 0.0
    %709 = vmatprep.subr.mxu0 0.0
    %710 = vmatpush1.msra.mxu0 0.0
    %711 = vmatprep.subr.mxu0 0.0
    %712 = vmatpush1.msra.mxu0 0.0
    %713 = vmatprep.subr.mxu0 0.0
    %714 = vmatpush1.msra.mxu0 0.0
    %715 = vmatprep.subr.mxu0 0.0
    %716 = vmatpush1.msra.mxu0 0.0
    %717 = vmatprep.subr.mxu0 0.0
    %718 = vmatpush1.msra.mxu0 0.0
    %719 = vmatprep.subr.mxu0 0.0
    %720 = vmatpush1.msra.mxu0 0.0
    %721 = vmatprep.subr.mxu0 0.0
    %722 = vmatpush1.msra.mxu0 0.0
    %723 = vmatprep.subr.mxu0 0.0
    %724 = vmatpush1.msra.mxu0 0.0
    %725 = vmatprep.subr.mxu0 0.0
    %726 = vmatpush1.msra.mxu0 0.0
    %727 = vmatprep.subr.mxu0 0.0
    %728 = vmatpush1.msra.mxu0 0.0
    %729 = vmatprep.mubr.f32.mxu0 0.0
    %730 = vmatmul.mubr.f32.gmra.mrb[0].mxu0 %v641
    %v731 = vpop.f32.mrb[0].mxu0
    %v732 = vadd.f32 %v663, %v731
    %v733 = vpop.f32.mrb[0].mxu0
    %734 = vdwg.mxu0
    %v735 = vld [vmem:[%s9] sm:$0xff]
    %v736 = vld [vmem:[%s9 + $0x8] sm:$0xff]
    %v737 = vld [vmem:[%s9 + $0x10] sm:$0xff]
    %v738 = vld [vmem:[%s9 + $0x18] sm:$0xff]
    %v739 = vld [vmem:[%s9 + $0x20] sm:$0xff]
    %v740 = vld [vmem:[%s9 + $0x28] sm:$0xff]
    %v741 = vld [vmem:[%s9 + $0x30] sm:$0xff]
    %v742 = vld [vmem:[%s9 + $0x38] sm:$0xff]
    %v743 = vld [vmem:[%s9 + $0x40] sm:$0xff]
    %v744 = vld [vmem:[%s9 + $0x48] sm:$0xff]
    %v745 = vld [vmem:[%s9 + $0x50] sm:$0xff]
    %v746 = vld [vmem:[%s9 + $0x58] sm:$0xff]
    %v747 = vld [vmem:[%s9 + $0x60] sm:$0xff]
    %v748 = vld [vmem:[%s9 + $0x68] sm:$0xff]
    %v749 = vld [vmem:[%s9 + $0x70] sm:$0xff]
    %v750 = vld [vmem:[%s9 + $0x78] sm:$0xff]
    %v751 = vld [vmem:[%s10] sm:$0x1]
    %v753 = vlaneseq
    %v754 = vshrl.u32 %v753, 7
    %v755 = vsub.s32 0, %v754
    %v756 = vrot.slane %v751, %v755
    %758 = vmatprep.subr.mxu0 0.0
    %759 = vmatpush1.msra.mxu0 %v735
    %760 = vmatprep.subr.mxu0 0.0
    %761 = vmatpush1.msra.mxu0 %v736
    %762 = vmatprep.subr.mxu0 0.0
    %763 = vmatpush1.msra.mxu0 %v737
    %764 = vmatprep.subr.mxu0 0.0
    %765 = vmatpush1.msra.mxu0 %v738
    %766 = vmatprep.subr.mxu0 0.0
    %767 = vmatpush1.msra.mxu0 %v739
    %768 = vmatprep.subr.mxu0 0.0
    %769 = vmatpush1.msra.mxu0 %v740
    %770 = vmatprep.subr.mxu0 0.0
    %771 = vmatpush1.msra.mxu0 %v741
    %772 = vmatprep.subr.mxu0 0.0
    %773 = vmatpush1.msra.mxu0 %v742
    %774 = vmatprep.subr.mxu0 0.0
    %775 = vmatpush1.msra.mxu0 %v743
    %776 = vmatprep.subr.mxu0 0.0
    %777 = vmatpush1.msra.mxu0 %v744
    %778 = vmatprep.subr.mxu0 0.0
    %779 = vmatpush1.msra.mxu0 %v745
    %780 = vmatprep.subr.mxu0 0.0
    %781 = vmatpush1.msra.mxu0 %v746
    %782 = vmatprep.subr.mxu0 0.0
    %783 = vmatpush1.msra.mxu0 %v747
    %784 = vmatprep.subr.mxu0 0.0
    %785 = vmatpush1.msra.mxu0 %v748
    %786 = vmatprep.subr.mxu0 0.0
    %787 = vmatpush1.msra.mxu0 %v749
    %788 = vmatprep.subr.mxu0 0.0
    %789 = vmatpush1.msra.mxu0 %v750
    %790 = vmatprep.subr.mxu0 0.0
    %791 = vmatpush1.msra.mxu0 0.0
    %792 = vmatprep.subr.mxu0 0.0
    %793 = vmatpush1.msra.mxu0 0.0
    %794 = vmatprep.subr.mxu0 0.0
    %795 = vmatpush1.msra.mxu0 0.0
    %796 = vmatprep.subr.mxu0 0.0
    %797 = vmatpush1.msra.mxu0 0.0
    %798 = vmatprep.subr.mxu0 0.0
    %799 = vmatpush1.msra.mxu0 0.0
    %800 = vmatprep.subr.mxu0 0.0
    %801 = vmatpush1.msra.mxu0 0.0
    %802 = vmatprep.subr.mxu0 0.0
    %803 = vmatpush1.msra.mxu0 0.0
    %804 = vmatprep.subr.mxu0 0.0
    %805 = vmatpush1.msra.mxu0 0.0
    %806 = vmatprep.subr.mxu0 0.0
    %807 = vmatpush1.msra.mxu0 0.0
    %808 = vmatprep.subr.mxu0 0.0
    %809 = vmatpush1.msra.mxu0 0.0
    %810 = vmatprep.subr.mxu0 0.0
    %811 = vmatpush1.msra.mxu0 0.0
    %812 = vmatprep.subr.mxu0 0.0
    %813 = vmatpush1.msra.mxu0 0.0
    %814 = vmatprep.subr.mxu0 0.0
    %815 = vmatpush1.msra.mxu0 0.0
    %816 = vmatprep.subr.mxu0 0.0
    %817 = vmatpush1.msra.mxu0 0.0
    %818 = vmatprep.subr.mxu0 0.0
    %819 = vmatpush1.msra.mxu0 0.0
    %820 = vmatprep.subr.mxu0 0.0
    %821 = vmatpush1.msra.mxu0 0.0
    %822 = vmatprep.mubr.f32.mxu0 0.0
    %823 = vmatmul.mubr.f32.gmra.mrb[0].mxu0 %v732
    %v824 = vpop.f32.mrb[0].mxu0
    %v825 = vadd.f32 %v756, %v824
    %v826 = vpop.f32.mrb[0].mxu0
    %827 = vdwg.mxu0
    %v828 = vmax.f32 %v825, 0.0
    %v829 = vld [vmem:[%s11] sm:$0xff]
    %v830 = vld [vmem:[%s11 + $0x8] sm:$0xff]
    %v831 = vld [vmem:[%s11 + $0x10] sm:$0xff]
    %v832 = vld [vmem:[%s11 + $0x18] sm:$0xff]
    %v833 = vld [vmem:[%s11 + $0x20] sm:$0xff]
    %v834 = vld [vmem:[%s11 + $0x28] sm:$0xff]
    %v835 = vld [vmem:[%s11 + $0x30] sm:$0xff]
    %v836 = vld [vmem:[%s11 + $0x38] sm:$0xff]
    %v837 = vld [vmem:[%s11 + $0x40] sm:$0xff]
    %v838 = vld [vmem:[%s11 + $0x48] sm:$0xff]
    %v839 = vld [vmem:[%s11 + $0x50] sm:$0xff]
    %v840 = vld [vmem:[%s11 + $0x58] sm:$0xff]
    %v841 = vld [vmem:[%s11 + $0x60] sm:$0xff]
    %v842 = vld [vmem:[%s11 + $0x68] sm:$0xff]
    %v843 = vld [vmem:[%s11 + $0x70] sm:$0xff]
    %v844 = vld [vmem:[%s11 + $0x78] sm:$0xff]
    %v845 = vld [vmem:[%s12] sm:$0x1]
    %v847 = vlaneseq
    %v848 = vshrl.u32 %v847, 7
    %v849 = vsub.s32 0, %v848
    %v850 = vrot.slane %v845, %v849
    %852 = vmatprep.subr.mxu0 0.0
    %853 = vmatpush1.msra.mxu0 %v829
    %854 = vmatprep.subr.mxu0 0.0
    %855 = vmatpush1.msra.mxu0 %v830
    %856 = vmatprep.subr.mxu0 0.0
    %857 = vmatpush1.msra.mxu0 %v831
    %858 = vmatprep.subr.mxu0 0.0
    %859 = vmatpush1.msra.mxu0 %v832
    %860 = vmatprep.subr.mxu0 0.0
    %861 = vmatpush1.msra.mxu0 %v833
    %862 = vmatprep.subr.mxu0 0.0
    %863 = vmatpush1.msra.mxu0 %v834
    %864 = vmatprep.subr.mxu0 0.0
    %865 = vmatpush1.msra.mxu0 %v835
    %866 = vmatprep.subr.mxu0 0.0
    %867 = vmatpush1.msra.mxu0 %v836
    %868 = vmatprep.subr.mxu0 0.0
    %869 = vmatpush1.msra.mxu0 %v837
    %870 = vmatprep.subr.mxu0 0.0
    %871 = vmatpush1.msra.mxu0 %v838
    %872 = vmatprep.subr.mxu0 0.0
    %873 = vmatpush1.msra.mxu0 %v839
    %874 = vmatprep.subr.mxu0 0.0
    %875 = vmatpush1.msra.mxu0 %v840
    %876 = vmatprep.subr.mxu0 0.0
    %877 = vmatpush1.msra.mxu0 %v841
    %878 = vmatprep.subr.mxu0 0.0
    %879 = vmatpush1.msra.mxu0 %v842
    %880 = vmatprep.subr.mxu0 0.0
    %881 = vmatpush1.msra.mxu0 %v843
    %882 = vmatprep.subr.mxu0 0.0
    %883 = vmatpush1.msra.mxu0 %v844
    %884 = vmatprep.subr.mxu0 0.0
    %885 = vmatpush1.msra.mxu0 0.0
    %886 = vmatprep.subr.mxu0 0.0
    %887 = vmatpush1.msra.mxu0 0.0
    %888 = vmatprep.subr.mxu0 0.0
    %889 = vmatpush1.msra.mxu0 0.0
    %890 = vmatprep.subr.mxu0 0.0
    %891 = vmatpush1.msra.mxu0 0.0
    %892 = vmatprep.subr.mxu0 0.0
    %893 = vmatpush1.msra.mxu0 0.0
    %894 = vmatprep.subr.mxu0 0.0
    %895 = vmatpush1.msra.mxu0 0.0
    %896 = vmatprep.subr.mxu0 0.0
    %897 = vmatpush1.msra.mxu0 0.0
    %898 = vmatprep.subr.mxu0 0.0
    %899 = vmatpush1.msra.mxu0 0.0
    %900 = vmatprep.subr.mxu0 0.0
    %901 = vmatpush1.msra.mxu0 0.0
    %902 = vmatprep.subr.mxu0 0.0
    %903 = vmatpush1.msra.mxu0 0.0
    %904 = vmatprep.subr.mxu0 0.0
    %905 = vmatpush1.msra.mxu0 0.0
    %906 = vmatprep.subr.mxu0 0.0
    %907 = vmatpush1.msra.mxu0 0.0
    %908 = vmatprep.subr.mxu0 0.0
    %909 = vmatpush1.msra.mxu0 0.0
    %910 = vmatprep.subr.mxu0 0.0
    %911 = vmatpush1.msra.mxu0 0.0
    %912 = vmatprep.subr.mxu0 0.0
    %913 = vmatpush1.msra.mxu0 0.0
    %914 = vmatprep.subr.mxu0 0.0
    %915 = vmatpush1.msra.mxu0 0.0
    %916 = vmatprep.mubr.f32.mxu0 0.0
    %917 = vmatmul.mubr.f32.gmra.mrb[0].mxu0 %v828
    %v918 = vpop.f32.mrb[0].mxu0
    %v919 = vadd.f32 %v850, %v918
    %v920 = vpop.f32.mrb[0].mxu0
    %921 = vdwg.mxu0
    %v922 = vmax.f32 %v919, 0.0
    %v923 = vld [vmem:[%s13] sm:$0xff]
    %v924 = vld [vmem:[%s13 + $0x8] sm:$0xff]
    %v925 = vld [vmem:[%s13 + $0x10] sm:$0xff]
    %v926 = vld [vmem:[%s13 + $0x18] sm:$0xff]
    %v927 = vld [vmem:[%s13 + $0x20] sm:$0xff]
    %v928 = vld [vmem:[%s13 + $0x28] sm:$0xff]
    %v929 = vld [vmem:[%s13 + $0x30] sm:$0xff]
    %v930 = vld [vmem:[%s13 + $0x38] sm:$0xff]
    %v931 = vld [vmem:[%s13 + $0x40] sm:$0xff]
    %v932 = vld [vmem:[%s13 + $0x48] sm:$0xff]
    %v933 = vld [vmem:[%s13 + $0x50] sm:$0xff]
    %v934 = vld [vmem:[%s13 + $0x58] sm:$0xff]
    %v935 = vld [vmem:[%s13 + $0x60] sm:$0xff]
    %v936 = vld [vmem:[%s13 + $0x68] sm:$0xff]
    %v937 = vld [vmem:[%s13 + $0x70] sm:$0xff]
    %v938 = vld [vmem:[%s13 + $0x78] sm:$0xff]
    %v939 = vld [vmem:[%s14] sm:$0x1]
    %v941 = vlaneseq
    %v942 = vshrl.u32 %v941, 7
    %v943 = vsub.s32 0, %v942
    %v944 = vrot.slane %v939, %v943
    %946 = vmatprep.subr.mxu0 0.0
    %947 = vmatpush1.msra.mxu0 %v923
    %948 = vmatprep.subr.mxu0 0.0
    %949 = vmatpush1.msra.mxu0 %v924
    %950 = vmatprep.subr.mxu0 0.0
    %951 = vmatpush1.msra.mxu0 %v925
    %952 = vmatprep.subr.mxu0 0.0
    %953 = vmatpush1.msra.mxu0 %v926
    %954 = vmatprep.subr.mxu0 0.0
    %955 = vmatpush1.msra.mxu0 %v927
    %956 = vmatprep.subr.mxu0 0.0
    %957 = vmatpush1.msra.mxu0 %v928
    %958 = vmatprep.subr.mxu0 0.0
    %959 = vmatpush1.msra.mxu0 %v929
    %960 = vmatprep.subr.mxu0 0.0
    %961 = vmatpush1.msra.mxu0 %v930
    %962 = vmatprep.subr.mxu0 0.0
    %963 = vmatpush1.msra.mxu0 %v931
    %964 = vmatprep.subr.mxu0 0.0
    %965 = vmatpush1.msra.mxu0 %v932
    %966 = vmatprep.subr.mxu0 0.0
    %967 = vmatpush1.msra.mxu0 %v933
    %968 = vmatprep.subr.mxu0 0.0
    %969 = vmatpush1.msra.mxu0 %v934
    %970 = vmatprep.subr.mxu0 0.0
    %971 = vmatpush1.msra.mxu0 %v935
    %972 = vmatprep.subr.mxu0 0.0
    %973 = vmatpush1.msra.mxu0 %v936
    %974 = vmatprep.subr.mxu0 0.0
    %975 = vmatpush1.msra.mxu0 %v937
    %976 = vmatprep.subr.mxu0 0.0
    %977 = vmatpush1.msra.mxu0 %v938
    %978 = vmatprep.subr.mxu0 0.0
    %979 = vmatpush1.msra.mxu0 0.0
    %980 = vmatprep.subr.mxu0 0.0
    %981 = vmatpush1.msra.mxu0 0.0
    %982 = vmatprep.subr.mxu0 0.0
    %983 = vmatpush1.msra.mxu0 0.0
    %984 = vmatprep.subr.mxu0 0.0
    %985 = vmatpush1.msra.mxu0 0.0
    %986 = vmatprep.subr.mxu0 0.0
    %987 = vmatpush1.msra.mxu0 0.0
    %988 = vmatprep.subr.mxu0 0.0
    %989 = vmatpush1.msra.mxu0 0.0
    %990 = vmatprep.subr.mxu0 0.0
    %991 = vmatpush1.msra.mxu0 0.0
    %992 = vmatprep.subr.mxu0 0.0
    %993 = vmatpush1.msra.mxu0 0.0
    %994 = vmatprep.subr.mxu0 0.0
    %995 = vmatpush1.msra.mxu0 0.0
    %996 = vmatprep.subr.mxu0 0.0
    %997 = vmatpush1.msra.mxu0 0.0
    %998 = vmatprep.subr.mxu0 0.0
    %999 = vmatpush1.msra.mxu0 0.0
    %1000 = vmatprep.subr.mxu0 0.0
    %1001 = vmatpush1.msra.mxu0 0.0
    %1002 = vmatprep.subr.mxu0 0.0
    %1003 = vmatpush1.msra.mxu0 0.0
    %1004 = vmatprep.subr.mxu0 0.0
    %1005 = vmatpush1.msra.mxu0 0.0
    %1006 = vmatprep.subr.mxu0 0.0
    %1007 = vmatpush1.msra.mxu0 0.0
    %1008 = vmatprep.subr.mxu0 0.0
    %1009 = vmatpush1.msra.mxu0 0.0
    %1010 = vmatprep.mubr.f32.mxu0 0.0
    %1011 = vmatmul.mubr.f32.gmra.mrb[0].mxu0 %v922
    %v1012 = vpop.f32.mrb[0].mxu0
    %v1013 = vadd.f32 %v944, %v1012
    %v1014 = vpop.f32.mrb[0].mxu0
    %1015 = vdwg.mxu0
    %v1016 = vmax.f32 %v1013, 0.0
    %v1017 = vld [vmem:[%s15] sm:$0xff]
    %v1018 = vld [vmem:[%s15 + $0x8] sm:$0xff]
    %v1019 = vld [vmem:[%s15 + $0x10] sm:$0xff]
    %v1020 = vld [vmem:[%s15 + $0x18] sm:$0xff]
    %v1021 = vld [vmem:[%s15 + $0x20] sm:$0xff]
    %v1022 = vld [vmem:[%s15 + $0x28] sm:$0xff]
    %v1023 = vld [vmem:[%s15 + $0x30] sm:$0xff]
    %v1024 = vld [vmem:[%s15 + $0x38] sm:$0xff]
    %v1025 = vld [vmem:[%s15 + $0x40] sm:$0xff]
    %v1026 = vld [vmem:[%s15 + $0x48] sm:$0xff]
    %v1027 = vld [vmem:[%s15 + $0x50] sm:$0xff]
    %v1028 = vld [vmem:[%s15 + $0x58] sm:$0xff]
    %v1029 = vld [vmem:[%s15 + $0x60] sm:$0xff]
    %v1030 = vld [vmem:[%s15 + $0x68] sm:$0xff]
    %v1031 = vld [vmem:[%s15 + $0x70] sm:$0xff]
    %v1032 = vld [vmem:[%s15 + $0x78] sm:$0xff]
    %v1033 = vld [vmem:[%s15 + $0x80] sm:$0xff]
    %v1034 = vld [vmem:[%s15 + $0x88] sm:$0xff]
    %v1035 = vld [vmem:[%s15 + $0x90] sm:$0xff]
    %v1036 = vld [vmem:[%s15 + $0x98] sm:$0xff]
    %v1037 = vld [vmem:[%s15 + $0xa0] sm:$0xff]
    %v1038 = vld [vmem:[%s15 + $0xa8] sm:$0xff]
    %v1039 = vld [vmem:[%s15 + $0xb0] sm:$0xff]
    %v1040 = vld [vmem:[%s15 + $0xb8] sm:$0xff]
    %v1041 = vld [vmem:[%s15 + $0xc0] sm:$0xff]
    %v1042 = vld [vmem:[%s15 + $0xc8] sm:$0xff]
    %v1043 = vld [vmem:[%s15 + $0xd0] sm:$0xff]
    %v1044 = vld [vmem:[%s15 + $0xd8] sm:$0xff]
    %v1045 = vld [vmem:[%s15 + $0xe0] sm:$0xff]
    %v1046 = vld [vmem:[%s15 + $0xe8] sm:$0xff]
    %v1047 = vld [vmem:[%s15 + $0xf0] sm:$0xff]
    %v1048 = vld [vmem:[%s15 + $0xf8] sm:$0xff]
    %v1049 = vld [vmem:[%s15 + $0x100] sm:$0xff]
    %v1050 = vld [vmem:[%s15 + $0x108] sm:$0xff]
    %v1051 = vld [vmem:[%s15 + $0x110] sm:$0xff]
    %v1052 = vld [vmem:[%s15 + $0x118] sm:$0xff]
    %v1053 = vld [vmem:[%s15 + $0x120] sm:$0xff]
    %v1054 = vld [vmem:[%s15 + $0x128] sm:$0xff]
    %v1055 = vld [vmem:[%s15 + $0x130] sm:$0xff]
    %v1056 = vld [vmem:[%s15 + $0x138] sm:$0xff]
    %v1057 = vld [vmem:[%s15 + $0x140] sm:$0xff]
    %v1058 = vld [vmem:[%s15 + $0x148] sm:$0xff]
    %v1059 = vld [vmem:[%s15 + $0x150] sm:$0xff]
    %v1060 = vld [vmem:[%s15 + $0x158] sm:$0xff]
    %v1061 = vld [vmem:[%s15 + $0x160] sm:$0xff]
    %v1062 = vld [vmem:[%s15 + $0x168] sm:$0xff]
    %v1063 = vld [vmem:[%s15 + $0x170] sm:$0xff]
    %v1064 = vld [vmem:[%s15 + $0x178] sm:$0xff]
    %v1065 = vld [vmem:[%s15 + $0x180] sm:$0xff]
    %v1066 = vld [vmem:[%s15 + $0x188] sm:$0xff]
    %v1067 = vld [vmem:[%s15 + $0x190] sm:$0xff]
    %v1068 = vld [vmem:[%s15 + $0x198] sm:$0xff]
    %v1069 = vld [vmem:[%s15 + $0x1a0] sm:$0xff]
    %v1070 = vld [vmem:[%s15 + $0x1a8] sm:$0xff]
    %v1071 = vld [vmem:[%s15 + $0x1b0] sm:$0xff]
    %v1072 = vld [vmem:[%s15 + $0x1b8] sm:$0xff]
    %v1073 = vld [vmem:[%s15 + $0x1c0] sm:$0xff]
    %v1074 = vld [vmem:[%s15 + $0x1c8] sm:$0xff]
    %v1075 = vld [vmem:[%s15 + $0x1d0] sm:$0xff]
    %v1076 = vld [vmem:[%s15 + $0x1d8] sm:$0xff]
    %v1077 = vld [vmem:[%s15 + $0x1e0] sm:$0xff]
    %v1078 = vld [vmem:[%s15 + $0x1e8] sm:$0xff]
    %v1079 = vld [vmem:[%s15 + $0x1f0] sm:$0xff]
    %v1080 = vld [vmem:[%s15 + $0x1f8] sm:$0xff]
    %v1081 = vld [vmem:[%s15 + $0x200] sm:$0xff]
    %v1082 = vld [vmem:[%s15 + $0x208] sm:$0xff]
    %v1083 = vld [vmem:[%s15 + $0x210] sm:$0xff]
    %v1084 = vld [vmem:[%s15 + $0x218] sm:$0xff]
    %v1085 = vld [vmem:[%s15 + $0x220] sm:$0xff]
    %v1086 = vld [vmem:[%s15 + $0x228] sm:$0xff]
    %v1087 = vld [vmem:[%s15 + $0x230] sm:$0xff]
    %v1088 = vld [vmem:[%s15 + $0x238] sm:$0xff]
    %v1089 = vld [vmem:[%s15 + $0x240] sm:$0xff]
    %v1090 = vld [vmem:[%s15 + $0x248] sm:$0xff]
    %v1091 = vld [vmem:[%s15 + $0x250] sm:$0xff]
    %v1092 = vld [vmem:[%s15 + $0x258] sm:$0xff]
    %v1093 = vld [vmem:[%s15 + $0x260] sm:$0xff]
    %v1094 = vld [vmem:[%s15 + $0x268] sm:$0xff]
    %v1095 = vld [vmem:[%s15 + $0x270] sm:$0xff]
    %v1096 = vld [vmem:[%s15 + $0x278] sm:$0xff]
    %v1097 = vld [vmem:[%s15 + $0x280] sm:$0xff]
    %v1098 = vld [vmem:[%s15 + $0x288] sm:$0xff]
    %v1099 = vld [vmem:[%s15 + $0x290] sm:$0xff]
    %v1100 = vld [vmem:[%s15 + $0x298] sm:$0xff]
    %v1101 = vld [vmem:[%s15 + $0x2a0] sm:$0xff]
    %v1102 = vld [vmem:[%s15 + $0x2a8] sm:$0xff]
    %v1103 = vld [vmem:[%s15 + $0x2b0] sm:$0xff]
    %v1104 = vld [vmem:[%s15 + $0x2b8] sm:$0xff]
    %v1105 = vld [vmem:[%s15 + $0x2c0] sm:$0xff]
    %v1106 = vld [vmem:[%s15 + $0x2c8] sm:$0xff]
    %v1107 = vld [vmem:[%s15 + $0x2d0] sm:$0xff]
    %v1108 = vld [vmem:[%s15 + $0x2d8] sm:$0xff]
    %v1109 = vld [vmem:[%s15 + $0x2e0] sm:$0xff]
    %v1110 = vld [vmem:[%s15 + $0x2e8] sm:$0xff]
    %v1111 = vld [vmem:[%s15 + $0x2f0] sm:$0xff]
    %v1112 = vld [vmem:[%s15 + $0x2f8] sm:$0xff]
    %v1113 = vld [vmem:[%s15 + $0x300] sm:$0xff]
    %v1114 = vld [vmem:[%s15 + $0x308] sm:$0xff]
    %v1115 = vld [vmem:[%s15 + $0x310] sm:$0xff]
    %v1116 = vld [vmem:[%s15 + $0x318] sm:$0xff]
    %v1117 = vld [vmem:[%s15 + $0x320] sm:$0xff]
    %v1118 = vld [vmem:[%s15 + $0x328] sm:$0xff]
    %v1119 = vld [vmem:[%s15 + $0x330] sm:$0xff]
    %v1120 = vld [vmem:[%s15 + $0x338] sm:$0xff]
    %v1121 = vld [vmem:[%s15 + $0x340] sm:$0xff]
    %v1122 = vld [vmem:[%s15 + $0x348] sm:$0xff]
    %v1123 = vld [vmem:[%s15 + $0x350] sm:$0xff]
    %v1124 = vld [vmem:[%s15 + $0x358] sm:$0xff]
    %v1125 = vld [vmem:[%s15 + $0x360] sm:$0xff]
    %v1126 = vld [vmem:[%s15 + $0x368] sm:$0xff]
    %v1127 = vld [vmem:[%s15 + $0x370] sm:$0xff]
    %v1128 = vld [vmem:[%s15 + $0x378] sm:$0xff]
    %v1129 = vld [vmem:[%s16] sm:$0x7f]
    %v1131 = vlaneseq
    %v1132 = vshrl.u32 %v1131, 7
    %v1133 = vsub.s32 0, %v1132
    %v1134 = vrot.slane %v1129, %v1133
    %v1135 = vlaneseq
    %v1136 = vshrl.u32 %v1135, 7
    %v1137 = vsub.s32 1, %v1136
    %v1138 = vrot.slane %v1129, %v1137
    %v1139 = vlaneseq
    %v1140 = vshrl.u32 %v1139, 7
    %v1141 = vsub.s32 2, %v1140
    %v1142 = vrot.slane %v1129, %v1141
    %v1143 = vlaneseq
    %v1144 = vshrl.u32 %v1143, 7
    %v1145 = vsub.s32 3, %v1144
    %v1146 = vrot.slane %v1129, %v1145
    %v1147 = vlaneseq
    %v1148 = vshrl.u32 %v1147, 7
    %v1149 = vsub.s32 4, %v1148
    %v1150 = vrot.slane %v1129, %v1149
    %v1151 = vlaneseq
    %v1152 = vshrl.u32 %v1151, 7
    %v1153 = vsub.s32 5, %v1152
    %v1154 = vrot.slane %v1129, %v1153
    %v1155 = vlaneseq
    %v1156 = vshrl.u32 %v1155, 7
    %v1157 = vsub.s32 6, %v1156
    %v1158 = vrot.slane %v1129, %v1157
    %1166 = vmatprep.subr.mxu0 %v1018
    %1167 = vmatpush1.msra.mxu0 %v1017
    %1168 = vmatprep.subr.mxu0 %v1025
    %1169 = vmatpush1.msra.mxu0 %v1024
    %1170 = vmatprep.subr.mxu0 %v1032
    %1171 = vmatpush1.msra.mxu0 %v1031
    %1172 = vmatprep.subr.mxu0 %v1039
    %1173 = vmatpush1.msra.mxu0 %v1038
    %1174 = vmatprep.subr.mxu0 %v1046
    %1175 = vmatpush1.msra.mxu0 %v1045
    %1176 = vmatprep.subr.mxu0 %v1053
    %1177 = vmatpush1.msra.mxu0 %v1052
    %1178 = vmatprep.subr.mxu0 %v1060
    %1179 = vmatpush1.msra.mxu0 %v1059
    %1180 = vmatprep.subr.mxu0 %v1067
    %1181 = vmatpush1.msra.mxu0 %v1066
    %1182 = vmatprep.subr.mxu0 %v1074
    %1183 = vmatpush1.msra.mxu0 %v1073
    %1184 = vmatprep.subr.mxu0 %v1081
    %1185 = vmatpush1.msra.mxu0 %v1080
    %1186 = vmatprep.subr.mxu0 %v1088
    %1187 = vmatpush1.msra.mxu0 %v1087
    %1188 = vmatprep.subr.mxu0 %v1095
    %1189 = vmatpush1.msra.mxu0 %v1094
    %1190 = vmatprep.subr.mxu0 %v1102
    %1191 = vmatpush1.msra.mxu0 %v1101
    %1192 = vmatprep.subr.mxu0 %v1109
    %1193 = vmatpush1.msra.mxu0 %v1108
    %1194 = vmatprep.subr.mxu0 %v1116
    %1195 = vmatpush1.msra.mxu0 %v1115
    %1196 = vmatprep.subr.mxu0 %v1123
    %1197 = vmatpush1.msra.mxu0 %v1122
    %1198 = vmatprep.subr.mxu0 0.0
    %1199 = vmatpush1.msra.mxu0 0.0
    %1200 = vmatprep.subr.mxu0 0.0
    %1201 = vmatpush1.msra.mxu0 0.0
    %1202 = vmatprep.subr.mxu0 0.0
    %1203 = vmatpush1.msra.mxu0 0.0
    %1204 = vmatprep.subr.mxu0 0.0
    %1205 = vmatpush1.msra.mxu0 0.0
    %1206 = vmatprep.subr.mxu0 0.0
    %1207 = vmatpush1.msra.mxu0 0.0
    %1208 = vmatprep.subr.mxu0 0.0
    %1209 = vmatpush1.msra.mxu0 0.0
    %1210 = vmatprep.subr.mxu0 0.0
    %1211 = vmatpush1.msra.mxu0 0.0
    %1212 = vmatprep.subr.mxu0 0.0
    %1213 = vmatpush1.msra.mxu0 0.0
    %1214 = vmatprep.subr.mxu0 0.0
    %1215 = vmatpush1.msra.mxu0 0.0
    %1216 = vmatprep.subr.mxu0 0.0
    %1217 = vmatpush1.msra.mxu0 0.0
    %1218 = vmatprep.subr.mxu0 0.0
    %1219 = vmatpush1.msra.mxu0 0.0
    %1220 = vmatprep.subr.mxu0 0.0
    %1221 = vmatpush1.msra.mxu0 0.0
    %1222 = vmatprep.subr.mxu0 0.0
    %1223 = vmatpush1.msra.mxu0 0.0
    %1224 = vmatprep.subr.mxu0 0.0
    %1225 = vmatpush1.msra.mxu0 0.0
    %1226 = vmatprep.subr.mxu0 0.0
    %1227 = vmatpush1.msra.mxu0 0.0
    %1228 = vmatprep.subr.mxu0 0.0
    %1229 = vmatpush1.msra.mxu0 0.0
    %1230 = vmatprep.mubr.f32.mxu0 0.0
    %1231 = vmatmul.mubr.f32.gmra.mrb[0].mxu0 %v1016
    %v1232 = vpop.f32.mrb[0].mxu0
    %v1233 = vadd.f32 %v1134, %v1232
    %v1234 = vpop.f32.mrb[0].mxu0
    %v1235 = vadd.f32 %v1138, %v1234
    %1236 = vdwg.mxu0
    %1237 = vmatprep.subr.mxu0 %v1020
    %1238 = vmatpush1.msra.mxu0 %v1019
    %1239 = vmatprep.subr.mxu0 %v1027
    %1240 = vmatpush1.msra.mxu0 %v1026
    %1241 = vmatprep.subr.mxu0 %v1034
    %1242 = vmatpush1.msra.mxu0 %v1033
    %1243 = vmatprep.subr.mxu0 %v1041
    %1244 = vmatpush1.msra.mxu0 %v1040
    %1245 = vmatprep.subr.mxu0 %v1048
    %1246 = vmatpush1.msra.mxu0 %v1047
    %1247 = vmatprep.subr.mxu0 %v1055
    %1248 = vmatpush1.msra.mxu0 %v1054
    %1249 = vmatprep.subr.mxu0 %v1062
    %1250 = vmatpush1.msra.mxu0 %v1061
    %1251 = vmatprep.subr.mxu0 %v1069
    %1252 = vmatpush1.msra.mxu0 %v1068
    %1253 = vmatprep.subr.mxu0 %v1076
    %1254 = vmatpush1.msra.mxu0 %v1075
    %1255 = vmatprep.subr.mxu0 %v1083
    %1256 = vmatpush1.msra.mxu0 %v1082
    %1257 = vmatprep.subr.mxu0 %v1090
    %1258 = vmatpush1.msra.mxu0 %v1089
    %1259 = vmatprep.subr.mxu0 %v1097
    %1260 = vmatpush1.msra.mxu0 %v1096
    %1261 = vmatprep.subr.mxu0 %v1104
    %1262 = vmatpush1.msra.mxu0 %v1103
    %1263 = vmatprep.subr.mxu0 %v1111
    %1264 = vmatpush1.msra.mxu0 %v1110
    %1265 = vmatprep.subr.mxu0 %v1118
    %1266 = vmatpush1.msra.mxu0 %v1117
    %1267 = vmatprep.subr.mxu0 %v1125
    %1268 = vmatpush1.msra.mxu0 %v1124
    %1269 = vmatprep.subr.mxu0 0.0
    %1270 = vmatpush1.msra.mxu0 0.0
    %1271 = vmatprep.subr.mxu0 0.0
    %1272 = vmatpush1.msra.mxu0 0.0
    %1273 = vmatprep.subr.mxu0 0.0
    %1274 = vmatpush1.msra.mxu0 0.0
    %1275 = vmatprep.subr.mxu0 0.0
    %1276 = vmatpush1.msra.mxu0 0.0
    %1277 = vmatprep.subr.mxu0 0.0
    %1278 = vmatpush1.msra.mxu0 0.0
    %1279 = vmatprep.subr.mxu0 0.0
    %1280 = vmatpush1.msra.mxu0 0.0
    %1281 = vmatprep.subr.mxu0 0.0
    %1282 = vmatpush1.msra.mxu0 0.0
    %1283 = vmatprep.subr.mxu0 0.0
    %1284 = vmatpush1.msra.mxu0 0.0
    %1285 = vmatprep.subr.mxu0 0.0
    %1286 = vmatpush1.msra.mxu0 0.0
    %1287 = vmatprep.subr.mxu0 0.0
    %1288 = vmatpush1.msra.mxu0 0.0
    %1289 = vmatprep.subr.mxu0 0.0
    %1290 = vmatpush1.msra.mxu0 0.0
    %1291 = vmatprep.subr.mxu0 0.0
    %1292 = vmatpush1.msra.mxu0 0.0
    %1293 = vmatprep.subr.mxu0 0.0
    %1294 = vmatpush1.msra.mxu0 0.0
    %1295 = vmatprep.subr.mxu0 0.0
    %1296 = vmatpush1.msra.mxu0 0.0
    %1297 = vmatprep.subr.mxu0 0.0
    %1298 = vmatpush1.msra.mxu0 0.0
    %1299 = vmatprep.subr.mxu0 0.0
    %1300 = vmatpush1.msra.mxu0 0.0
    %1301 = vmatprep.mubr.f32.mxu0 0.0
    %1302 = vmatmul.mubr.f32.gmra.mrb[0].mxu0 %v1016
    %v1303 = vpop.f32.mrb[0].mxu0
    %v1304 = vadd.f32 %v1142, %v1303
    %v1305 = vpop.f32.mrb[0].mxu0
    %v1306 = vadd.f32 %v1146, %v1305
    %1307 = vdwg.mxu0
    %1308 = vmatprep.subr.mxu0 %v1022
    %1309 = vmatpush1.msra.mxu0 %v1021
    %1310 = vmatprep.subr.mxu0 %v1029
    %1311 = vmatpush1.msra.mxu0 %v1028
    %1312 = vmatprep.subr.mxu0 %v1036
    %1313 = vmatpush1.msra.mxu0 %v1035
    %1314 = vmatprep.subr.mxu0 %v1043
    %1315 = vmatpush1.msra.mxu0 %v1042
    %1316 = vmatprep.subr.mxu0 %v1050
    %1317 = vmatpush1.msra.mxu0 %v1049
    %1318 = vmatprep.subr.mxu0 %v1057
    %1319 = vmatpush1.msra.mxu0 %v1056
    %1320 = vmatprep.subr.mxu0 %v1064
    %1321 = vmatpush1.msra.mxu0 %v1063
    %1322 = vmatprep.subr.mxu0 %v1071
    %1323 = vmatpush1.msra.mxu0 %v1070
    %1324 = vmatprep.subr.mxu0 %v1078
    %1325 = vmatpush1.msra.mxu0 %v1077
    %1326 = vmatprep.subr.mxu0 %v1085
    %1327 = vmatpush1.msra.mxu0 %v1084
    %1328 = vmatprep.subr.mxu0 %v1092
    %1329 = vmatpush1.msra.mxu0 %v1091
    %1330 = vmatprep.subr.mxu0 %v1099
    %1331 = vmatpush1.msra.mxu0 %v1098
    %1332 = vmatprep.subr.mxu0 %v1106
    %1333 = vmatpush1.msra.mxu0 %v1105
    %1334 = vmatprep.subr.mxu0 %v1113
    %1335 = vmatpush1.msra.mxu0 %v1112
    %1336 = vmatprep.subr.mxu0 %v1120
    %1337 = vmatpush1.msra.mxu0 %v1119
    %1338 = vmatprep.subr.mxu0 %v1127
    %1339 = vmatpush1.msra.mxu0 %v1126
    %1340 = vmatprep.subr.mxu0 0.0
    %1341 = vmatpush1.msra.mxu0 0.0
    %1342 = vmatprep.subr.mxu0 0.0
    %1343 = vmatpush1.msra.mxu0 0.0
    %1344 = vmatprep.subr.mxu0 0.0
    %1345 = vmatpush1.msra.mxu0 0.0
    %1346 = vmatprep.subr.mxu0 0.0
    %1347 = vmatpush1.msra.mxu0 0.0
    %1348 = vmatprep.subr.mxu0 0.0
    %1349 = vmatpush1.msra.mxu0 0.0
    %1350 = vmatprep.subr.mxu0 0.0
    %1351 = vmatpush1.msra.mxu0 0.0
    %1352 = vmatprep.subr.mxu0 0.0
    %1353 = vmatpush1.msra.mxu0 0.0
    %1354 = vmatprep.subr.mxu0 0.0
    %1355 = vmatpush1.msra.mxu0 0.0
    %1356 = vmatprep.subr.mxu0 0.0
    %1357 = vmatpush1.msra.mxu0 0.0
    %1358 = vmatprep.subr.mxu0 0.0
    %1359 = vmatpush1.msra.mxu0 0.0
    %1360 = vmatprep.subr.mxu0 0.0
    %1361 = vmatpush1.msra.mxu0 0.0
    %1362 = vmatprep.subr.mxu0 0.0
    %1363 = vmatpush1.msra.mxu0 0.0
    %1364 = vmatprep.subr.mxu0 0.0
    %1365 = vmatpush1.msra.mxu0 0.0
    %1366 = vmatprep.subr.mxu0 0.0
    %1367 = vmatpush1.msra.mxu0 0.0
    %1368 = vmatprep.subr.mxu0 0.0
    %1369 = vmatpush1.msra.mxu0 0.0
    %1370 = vmatprep.subr.mxu0 0.0
    %1371 = vmatpush1.msra.mxu0 0.0
    %1372 = vmatprep.mubr.f32.mxu0 0.0
    %1373 = vmatmul.mubr.f32.gmra.mrb[0].mxu0 %v1016
    %v1374 = vpop.f32.mrb[0].mxu0
    %v1375 = vadd.f32 %v1150, %v1374
    %v1376 = vpop.f32.mrb[0].mxu0
    %v1377 = vadd.f32 %v1154, %v1376
    %1378 = vdwg.mxu0
    %1379 = vmatprep.subr.mxu0 0.0
    %1380 = vmatpush1.msra.mxu0 %v1023
    %1381 = vmatprep.subr.mxu0 0.0
    %1382 = vmatpush1.msra.mxu0 %v1030
    %1383 = vmatprep.subr.mxu0 0.0
    %1384 = vmatpush1.msra.mxu0 %v1037
    %1385 = vmatprep.subr.mxu0 0.0
    %1386 = vmatpush1.msra.mxu0 %v1044
    %1387 = vmatprep.subr.mxu0 0.0
    %1388 = vmatpush1.msra.mxu0 %v1051
    %1389 = vmatprep.subr.mxu0 0.0
    %1390 = vmatpush1.msra.mxu0 %v1058
    %1391 = vmatprep.subr.mxu0 0.0
    %1392 = vmatpush1.msra.mxu0 %v1065
    %1393 = vmatprep.subr.mxu0 0.0
    %1394 = vmatpush1.msra.mxu0 %v1072
    %1395 = vmatprep.subr.mxu0 0.0
    %1396 = vmatpush1.msra.mxu0 %v1079
    %1397 = vmatprep.subr.mxu0 0.0
    %1398 = vmatpush1.msra.mxu0 %v1086
    %1399 = vmatprep.subr.mxu0 0.0
    %1400 = vmatpush1.msra.mxu0 %v1093
    %1401 = vmatprep.subr.mxu0 0.0
    %1402 = vmatpush1.msra.mxu0 %v1100
    %1403 = vmatprep.subr.mxu0 0.0
    %1404 = vmatpush1.msra.mxu0 %v1107
    %1405 = vmatprep.subr.mxu0 0.0
    %1406 = vmatpush1.msra.mxu0 %v1114
    %1407 = vmatprep.subr.mxu0 0.0
    %1408 = vmatpush1.msra.mxu0 %v1121
    %1409 = vmatprep.subr.mxu0 0.0
    %1410 = vmatpush1.msra.mxu0 %v1128
    %1411 = vmatprep.subr.mxu0 0.0
    %1412 = vmatpush1.msra.mxu0 0.0
    %1413 = vmatprep.subr.mxu0 0.0
    %1414 = vmatpush1.msra.mxu0 0.0
    %1415 = vmatprep.subr.mxu0 0.0
    %1416 = vmatpush1.msra.mxu0 0.0
    %1417 = vmatprep.subr.mxu0 0.0
    %1418 = vmatpush1.msra.mxu0 0.0
    %1419 = vmatprep.subr.mxu0 0.0
    %1420 = vmatpush1.msra.mxu0 0.0
    %1421 = vmatprep.subr.mxu0 0.0
    %1422 = vmatpush1.msra.mxu0 0.0
    %1423 = vmatprep.subr.mxu0 0.0
    %1424 = vmatpush1.msra.mxu0 0.0
    %1425 = vmatprep.subr.mxu0 0.0
    %1426 = vmatpush1.msra.mxu0 0.0
    %1427 = vmatprep.subr.mxu0 0.0
    %1428 = vmatpush1.msra.mxu0 0.0
    %1429 = vmatprep.subr.mxu0 0.0
    %1430 = vmatpush1.msra.mxu0 0.0
    %1431 = vmatprep.subr.mxu0 0.0
    %1432 = vmatpush1.msra.mxu0 0.0
    %1433 = vmatprep.subr.mxu0 0.0
    %1434 = vmatpush1.msra.mxu0 0.0
    %1435 = vmatprep.subr.mxu0 0.0
    %1436 = vmatpush1.msra.mxu0 0.0
    %1437 = vmatprep.subr.mxu0 0.0
    %1438 = vmatpush1.msra.mxu0 0.0
    %1439 = vmatprep.subr.mxu0 0.0
    %1440 = vmatpush1.msra.mxu0 0.0
    %1441 = vmatprep.subr.mxu0 0.0
    %1442 = vmatpush1.msra.mxu0 0.0
    %1443 = vmatprep.mubr.f32.mxu0 0.0
    %1444 = vmatmul.mubr.f32.gmra.mrb[0].mxu0 %v1016
    %v1445 = vpop.f32.mrb[0].mxu0
    %v1446 = vadd.f32 %v1158, %v1445
    %v1447 = vpop.f32.mrb[0].mxu0
    %1448 = vdwg.mxu0
    %v1449 = vxor.u32 %v1233, 2147483648
    %v1450 = vxor.u32 %v1235, 2147483648
    %v1451 = vxor.u32 %v1304, 2147483648
    %v1452 = vxor.u32 %v1306, 2147483648
    %v1453 = vxor.u32 %v1375, 2147483648
    %v1454 = vxor.u32 %v1377, 2147483648
    %v1455 = vxor.u32 %v1446, 2147483648
    %v1456 = vmul.f32 %v1449, 1.442695
    %v1457 = vpow.pop %v1456
    %v1458 = vmul.f32 %v1450, 1.442695
    %v1459 = vpow.pop %v1458
    %v1460 = vmul.f32 %v1451, 1.442695
    %v1461 = vpow.pop %v1460
    %v1462 = vmul.f32 %v1452, 1.442695
    %v1463 = vpow.pop %v1462
    %v1464 = vmul.f32 %v1453, 1.442695
    %v1465 = vpow.pop %v1464
    %v1466 = vmul.f32 %v1454, 1.442695
    %v1467 = vpow.pop %v1466
    %v1468 = vmul.f32 %v1455, 1.442695
    %v1469 = vpow.pop %v1468
    %v1470 = vadd.f32 %v1457, 1.0
    %v1471 = vadd.f32 %v1459, 1.0
    %v1472 = vadd.f32 %v1461, 1.0
    %v1473 = vadd.f32 %v1463, 1.0
    %v1474 = vadd.f32 %v1465, 1.0
    %v1475 = vadd.f32 %v1467, 1.0
    %v1476 = vadd.f32 %v1469, 1.0
    %v1477 = vrcp.pop %v1470
    %v1478 = vmul.f32 1.0, %v1477
    %v1479 = vrcp.pop %v1471
    %v1480 = vmul.f32 1.0, %v1479
    %v1481 = vrcp.pop %v1472
    %v1482 = vmul.f32 1.0, %v1481
    %v1483 = vrcp.pop %v1473
    %v1484 = vmul.f32 1.0, %v1483
    %v1485 = vrcp.pop %v1474
    %v1486 = vmul.f32 1.0, %v1485
    %v1487 = vrcp.pop %v1475
    %v1488 = vmul.f32 1.0, %v1487
    %v1489 = vrcp.pop %v1476
    %v1490 = vmul.f32 1.0, %v1489
    %1491 = vst [vmem:[#allocation2] sm:$0xff] %v1478
    %1492 = vst [vmem:[#allocation2 + $0x8] sm:$0xff] %v1480
    %1493 = vst [vmem:[#allocation2 + $0x10] sm:$0xff] %v1482
    %1494 = vst [vmem:[#allocation2 + $0x18] sm:$0xff] %v1484
    %1495 = vst [vmem:[#allocation2 + $0x20] sm:$0xff] %v1486
    %1496 = vst [vmem:[#allocation2 + $0x28] sm:$0xff] %v1488
    %1497 = vst.msk [vmem:[#allocation2 + $0x30] sm:$0xff] %vm169, %v1490
    // Predicated region
    $region70: #{tpu_custom_call.1} parent=1 // pred_check
      _
    $region71: #{tpu_custom_call.1} parent=1 // pred_check_branch
      %1499 = sbr.rel (0) target = $region73
    $region72: #{tpu_custom_call.1} parent=1 // pred_region
      %s1501 = ssub.s32 896, 896
      %1502 = vsyncadd [#allocation3], %s1501
      %s1504 = sshll.u32 [#allocation2], 4
      %s1505 = int_to_ptr.vmem [resolvable:$true] %s1504
      %1507 = dma.vmem_to_hbm [thread:$0]  %s1505, 896, %s17, [#allocation3]
    $region73: #{tpu_custom_call.1} parent=1 // pred_fallthru
      _
    // Predicated region
    $region74: #{tpu_custom_call.1} parent=1 // pred_check
      _
    $region75: #{tpu_custom_call.1} parent=1 // pred_check_branch
      %1509 = sbr.rel (0) target = $region77
    $region76: #{tpu_custom_call.1} parent=1 // pred_region
      %1510 = dma.done [#allocation3], 896
    $region77: #{tpu_custom_call.1} parent=1 // pred_fallthru
      _
    %1511 = vsyncpa [#allocation3], 1

</llo_original>
